<compile_context>
chip_gen: v7x
topology: tpu7x:2x2x1
jax: 0.10.0
libtpu: 0.0.40
codegen_flags: <defaults>
</compile_context>

<pallas_src>
import functools

import jax
import jax.numpy as jnp
from jax import lax
from jax.experimental import pallas as pl
from jax.experimental.pallas import tpu as pltpu


# --------------------------------------------------------------------------
# tiling helper
# --------------------------------------------------------------------------
def _pick_tile(dim, preferred, align):
    """Largest tile <= preferred that divides `dim` and is a multiple of
    `align`; falls back to the full extent (always a legal block shape)."""
    if dim <= preferred:
        return dim
    t = (preferred // align) * align
    while t >= align:
        if dim % t == 0:
            return t
        t -= align
    return dim


# --------------------------------------------------------------------------
# Pallas kernels
# --------------------------------------------------------------------------
def _matmul_kernel(*refs, nk, activation, has_residual):
    """o = act(x @ w + b) [+ residual], K tiled with f32 accumulator."""
    if has_residual:
        x_ref, w_ref, b_ref, r_ref, o_ref, acc_ref = refs
    else:
        x_ref, w_ref, b_ref, o_ref, acc_ref = refs
        r_ref = None

    @pl.when(pl.program_id(2) == 0)
    def _():
        acc_ref[...] = jnp.zeros_like(acc_ref)

    acc_ref[...] += jnp.dot(
        x_ref[...].astype(jnp.bfloat16),
        w_ref[...].astype(jnp.bfloat16),
        preferred_element_type=jnp.float32)

    @pl.when(pl.program_id(2) == nk - 1)
    def _():
        out = acc_ref[...] + b_ref[...].astype(jnp.float32)
        if activation == "gelu":
            # TODO(synk): torch nn.GELU default is exact erf; tanh approximation
            # is used here for guaranteed Mosaic lowering.
            out = jax.nn.gelu(out, approximate=True)
        if has_residual:
            out = out + r_ref[...].astype(jnp.float32)
        o_ref[...] = out.astype(o_ref.dtype)


def matmul(x, w, b, residual=None, activation=None, out_dtype=jnp.float32,
           tm=256, tn=256, tk=512):
    M, K = x.shape
    N = w.shape[1]
    tm = _pick_tile(M, tm, 8)
    tn = _pick_tile(N, tn, 128)
    tk = _pick_tile(K, tk, 128)
    nk = K // tk
    has_residual = residual is not None

    kernel = functools.partial(_matmul_kernel, nk=nk, activation=activation,
                               has_residual=has_residual)
    in_specs = [
        pl.BlockSpec((tm, tk), lambda i, j, k: (i, k)),
        pl.BlockSpec((tk, tn), lambda i, j, k: (k, j)),
        pl.BlockSpec((1, tn), lambda i, j, k: (0, j)),
    ]
    inputs = [x, w, b.reshape(1, N)]
    if has_residual:
        in_specs.append(pl.BlockSpec((tm, tn), lambda i, j, k: (i, j)))
        inputs.append(residual)

    return pl.pallas_call(
        kernel,
        out_shape=jax.ShapeDtypeStruct((M, N), out_dtype),
        grid=(M // tm, N // tn, nk),
        in_specs=in_specs,
        out_specs=pl.BlockSpec((tm, tn), lambda i, j, k: (i, j)),
        scratch_shapes=[pltpu.VMEM((tm, tn), jnp.float32)],
        compiler_params=pltpu.CompilerParams(
            dimension_semantics=("parallel", "parallel", "arbitrary")),
    )(*inputs)


def _ln_linear_kernel(x_ref, g_ref, bt_ref, w_ref, b_ref, o_ref, *, eps,
                      activation):
    """o = act(LayerNorm(x) @ w + b). LN stats in f32, matmul feeds in bf16."""
    x = x_ref[...].astype(jnp.float32)
    mean = jnp.mean(x, axis=-1, keepdims=True)
    var = jnp.mean(jnp.square(x - mean), axis=-1, keepdims=True)
    xn = (x - mean) * lax.rsqrt(var + eps)
    xn = xn * g_ref[...] + bt_ref[...]
    out = jnp.dot(xn.astype(jnp.bfloat16), w_ref[...].astype(jnp.bfloat16),
                  preferred_element_type=jnp.float32)
    out = out + b_ref[...].astype(jnp.float32)
    if activation == "gelu":
        # TODO(synk): tanh approximation of GELU (see note above).
        out = jax.nn.gelu(out, approximate=True)
    o_ref[...] = out.astype(o_ref.dtype)


def ln_linear(x, g, beta, w, b, activation=None, eps=1e-6,
              out_dtype=jnp.float32, tm=256, tn=256):
    # K (= embed dim) is kept un-tiled so LN stats are exact per M tile.
    M, K = x.shape
    N = w.shape[1]
    tm = _pick_tile(M, tm, 8)
    tn = _pick_tile(N, tn, 128)
    kernel = functools.partial(_ln_linear_kernel, eps=eps, activation=activation)
    return pl.pallas_call(
        kernel,
        out_shape=jax.ShapeDtypeStruct((M, N), out_dtype),
        grid=(M // tm, N // tn),
        in_specs=[
            pl.BlockSpec((tm, K), lambda i, j: (i, 0)),
            pl.BlockSpec((1, K), lambda i, j: (0, 0)),
            pl.BlockSpec((1, K), lambda i, j: (0, 0)),
            pl.BlockSpec((K, tn), lambda i, j: (0, j)),
            pl.BlockSpec((1, tn), lambda i, j: (0, j)),
        ],
        out_specs=pl.BlockSpec((tm, tn), lambda i, j: (i, j)),
        compiler_params=pltpu.CompilerParams(
            dimension_semantics=("parallel", "parallel")),
    )(x, g.reshape(1, K), beta.reshape(1, K), w, b.reshape(1, N))


def _attn_kernel(qkv_ref, o_ref, *, n_heads, scale):
    """All heads of one batch element. qkv layout: [q(h0..), k(h0..), v(h0..)]."""
    E = o_ref.shape[2]
    D = E // n_heads
    qkv = qkv_ref[0]                                   # (S, 3E)
    outs = []
    for h in range(n_heads):                           # static unroll
        q = (qkv[:, h * D:(h + 1) * D].astype(jnp.float32) * scale
             ).astype(jnp.bfloat16)                    # scale folded into q
        k = qkv[:, E + h * D:E + (h + 1) * D].astype(jnp.bfloat16)
        v = qkv[:, 2 * E + h * D:2 * E + (h + 1) * D].astype(jnp.bfloat16)
        # q . k^T without materializing a transpose: contract the D axis.
        s = lax.dot_general(q, k, (((1,), (1,)), ((), ())),
                            preferred_element_type=jnp.float32)    # (S, S)
        m = jnp.max(s, axis=-1, keepdims=True)
        p = jnp.exp(s - m)
        denom = jnp.sum(p, axis=-1, keepdims=True)
        p = p * pl.reciprocal(denom, approx=True)
        outs.append(jnp.dot(p.astype(jnp.bfloat16), v,
                            preferred_element_type=jnp.float32))   # (S, D)
    # single lane-dense (S, E) store, already in PyTorch's head-concat layout
    o_ref[0] = jnp.concatenate(outs, axis=-1).astype(o_ref.dtype)


def attention(qkv, n_heads, scale, out_dtype=jnp.bfloat16):
    B, S, E3 = qkv.shape
    E = E3 // 3
    kernel = functools.partial(_attn_kernel, n_heads=n_heads, scale=scale)
    return pl.pallas_call(
        kernel,
        out_shape=jax.ShapeDtypeStruct((B, S, E), out_dtype),
        grid=(B,),
        in_specs=[pl.BlockSpec((1, S, E3), lambda bi: (bi, 0, 0))],
        out_specs=pl.BlockSpec((1, S, E), lambda bi: (bi, 0, 0)),
        compiler_params=pltpu.CompilerParams(
            dimension_semantics=("parallel",)),
    )(qkv)


# --------------------------------------------------------------------------
# Parameter initialization (deterministic, shapes from ViT.__init__)
# --------------------------------------------------------------------------
def init_vit_params(key, *, img_size, patch_size, in_chs, n_classes,
                    embed_dim, n_blocks, n_heads, mlp_ratio):
    n_patches = (img_size // patch_size) ** 2
    hidden = int(embed_dim * mlp_ratio)
    cnt = [0]

    def nxt(shape, dtype=jnp.float32, scale=0.02):
        cnt[0] += 1
        v = scale * jax.random.normal(
            jax.random.fold_in(key, cnt[0]), shape, jnp.float32)
        return v.astype(dtype)

    bf16 = jnp.bfloat16  # matrix weights kept in bf16 (MXU feeds / half DMA)
    params = {
        # PatchEmbedder: Conv2d(in_chs, E, kernel=patch, stride=patch) as matmul
        "patch_w": nxt((in_chs * patch_size * patch_size, embed_dim), bf16),
        "patch_b": nxt((embed_dim,)),
        "cls_token": nxt((1, 1, embed_dim)),
        "pos_emb": nxt((1, n_patches + 1, embed_dim)),
        "ln_g": jnp.ones((embed_dim,), jnp.float32),
        "ln_b": jnp.zeros((embed_dim,), jnp.float32),
        "head_w": nxt((embed_dim, n_classes), bf16),
        "head_b": nxt((n_classes,)),
        "blocks": [],
    }
    for _ in range(n_blocks):
        params["blocks"].append({
            "ln1_g": jnp.ones((embed_dim,), jnp.float32),
            "ln1_b": jnp.zeros((embed_dim,), jnp.float32),
            "qkv_w": nxt((embed_dim, 3 * embed_dim), bf16),
            "qkv_b": nxt((3 * embed_dim,)),
            "proj_w": nxt((embed_dim, embed_dim), bf16),
            "proj_b": nxt((embed_dim,)),
            "ln2_g": jnp.ones((embed_dim,), jnp.float32),
            "ln2_b": jnp.zeros((embed_dim,), jnp.float32),
            "fc1_w": nxt((embed_dim, hidden), bf16),
            "fc1_b": nxt((hidden,)),
            "fc2_w": nxt((hidden, embed_dim), bf16),
            "fc2_b": nxt((embed_dim,)),
        })
    return params


# --------------------------------------------------------------------------
# ViT forward pass
# --------------------------------------------------------------------------
def vit_forward(params, imgs, *, patch_size, n_heads):
    B, C, H, W = imgs.shape
    P = patch_size
    Hp, Wp = H // P, W // P
    E = params["patch_w"].shape[1]
    D = E // n_heads
    scale = D ** -0.5

    # Patch embedding: stride-P conv == im2col (layout glue) + tiled Pallas matmul
    # (PyTorch conv weight [E, C, P, P] flattened as C,P,P matches this order).
    patches = imgs.reshape(B, C, Hp, P, Wp, P).transpose(0, 2, 4, 1, 3, 5)
    patches = patches.reshape(B * Hp * Wp, C * P * P)
    x = matmul(patches, params["patch_w"], params["patch_b"])       # (B*Np, E) f32

    Np = Hp * Wp
    S = Np + 1
    x = x.reshape(B, Np, E)
    cls = jnp.broadcast_to(params["cls_token"], (B, 1, E)).astype(x.dtype)
    x = jnp.concatenate([cls, x], axis=1) + params["pos_emb"]       # (B, S, E)
    # TODO(synk): pos_drop / attn_drop / proj dropout are identity (eval mode).

    x = x.reshape(B * S, E)          # f32 residual stream, kept 2-D throughout
    for blk in params["blocks"]:
        # ---- attention: LN fused into qkv matmul, residual fused into proj ----
        qkv = ln_linear(x, blk["ln1_g"], blk["ln1_b"],
                        blk["qkv_w"], blk["qkv_b"],
                        out_dtype=jnp.bfloat16)                     # (B*S, 3E)
        attn = attention(qkv.reshape(B, S, 3 * E), n_heads, scale)  # (B, S, E)
        x = matmul(attn.reshape(B * S, E), blk["proj_w"], blk["proj_b"],
                   residual=x)                                      # (B*S, E) f32

        # ---- MLP: LN fused into fc1 (+GELU), residual fused into fc2 ----
        h = ln_linear(x, blk["ln2_g"], blk["ln2_b"],
                      blk["fc1_w"], blk["fc1_b"],
                      activation="gelu", out_dtype=jnp.bfloat16)    # (B*S, hidden)
        x = matmul(h, blk["fc2_w"], blk["fc2_b"], residual=x)       # (B*S, E) f32

    # Final LN + head: PyTorch LNs all tokens then takes row 0; applying LN only
    # to the CLS rows yields identical logits and skips the dead work.
    cls_rows = x.reshape(B, S, E)[:, 0]                             # (B, E)
    logits = ln_linear(cls_rows, params["ln_g"], params["ln_b"],
                       params["head_w"], params["head_b"])          # (B, n_classes)
    return logits


# --------------------------------------------------------------------------
if __name__ == "__main__":
    # small configuration consistent with the module's forward
    B, IN_CHS, IMG, PATCH = 2, 4, 16, 4
    EMBED, HEADS, BLOCKS, NCLS = 32, 4, 2, 10
    MLP_RATIO = 2.0

    key = jax.random.PRNGKey(0)
    params = init_vit_params(
        jax.random.fold_in(key, 1),
        img_size=IMG, patch_size=PATCH, in_chs=IN_CHS, n_classes=NCLS,
        embed_dim=EMBED, n_blocks=BLOCKS, n_heads=HEADS, mlp_ratio=MLP_RATIO)

    imgs = jax.random.normal(jax.random.fold_in(key, 2),
                             (B, IN_CHS, IMG, IMG), jnp.float32)

    fwd = jax.jit(functools.partial(vit_forward, patch_size=PATCH, n_heads=HEADS))
    logits = fwd(params, imgs)
    jax.block_until_ready(logits)

    assert logits.shape == (B, NCLS), logits.shape
    assert jnp.all(jnp.isfinite(logits))
    print("KERNEL_OK")
</pallas_src>

<mosaic_0001>
module attributes {stable_mosaic.version = 11 : i64} {
  func.func @_matmul_kernel(%arg0: i32, %arg1: i32, %arg2: i32, %arg3: memref<32x64xf32, #tpu.memory_space<vmem>>, %arg4: memref<64x32xbf16, #tpu.memory_space<vmem>>, %arg5: memref<1x32xf32, #tpu.memory_space<vmem>>, %arg6: memref<32x32xf32, #tpu.memory_space<vmem>>, %arg7: memref<32x32xf32, #tpu.memory_space<vmem>>) attributes {dimension_semantics = [#tpu.dimension_semantics<parallel>, #tpu.dimension_semantics<parallel>, #tpu.dimension_semantics<arbitrary>], iteration_bounds = array<i64: 1, 1, 1>, scalar_prefetch = 0 : i64, scratch_operands = 1 : i64, tpu.core_type = #tpu.core_type<tc>, window_params = [{transform_indices = @transform_0, window_bounds = array<i64: 32, 64>}, {transform_indices = @transform_1, window_bounds = array<i64: 64, 32>}, {transform_indices = @transform_2, window_bounds = array<i64: 1, 32>}, {transform_indices = @transform_3, window_bounds = array<i64: 32, 32>}]} {
    %c0_i32 = arith.constant 0 : i32
    %0 = arith.cmpi eq, %arg2, %c0_i32 : i32
    %1 = arith.extui %0 : i1 to i32
    %c0_i32_0 = arith.constant 0 : i32
    %2 = arith.cmpi ne, %1, %c0_i32_0 : i32
    scf.if %2 {
      %cst_10 = arith.constant 0.000000e+00 : f32
      %13 = vector.broadcast %cst_10 : f32 to vector<32x32xf32>
      %c0_11 = arith.constant 0 : index
      %c0_12 = arith.constant 0 : index
      %14 = vector.load %arg7[%c0_11, %c0_12] : memref<32x32xf32, #tpu.memory_space<vmem>>, vector<32x32xf32>
      tpu.vector_store %arg7[%c0_11, %c0_12], %13 {strides = array<i32>} : memref<32x32xf32, #tpu.memory_space<vmem>>, vector<32x32xf32>,
    } else {
    }
    %c0 = arith.constant 0 : index
    %c0_1 = arith.constant 0 : index
    %3 = vector.load %arg7[%c0, %c0_1] : memref<32x32xf32, #tpu.memory_space<vmem>>, vector<32x32xf32>
    %c0_2 = arith.constant 0 : index
    %c0_3 = arith.constant 0 : index
    %4 = vector.load %arg3[%c0_2, %c0_3] : memref<32x64xf32, #tpu.memory_space<vmem>>, vector<32x64xf32>
    %5 = arith.truncf %4 : vector<32x64xf32> to vector<32x64xbf16>
    %c0_4 = arith.constant 0 : index
    %c0_5 = arith.constant 0 : index
    %6 = vector.load %arg4[%c0_4, %c0_5] : memref<64x32xbf16, #tpu.memory_space<vmem>>, vector<64x32xbf16>
    %cst = arith.constant dense<0.000000e+00> : vector<32x32xf32>
    %7 = tpu.matmul %5, %6, %cst {dimension_numbers = #tpu.dot_dimension_numbers<[1], [0], [0], [1], [0, 0, 1, 1], [], []>} : vector<32x64xbf16>, vector<64x32xbf16>, vector<32x32xf32> -> vector<32x32xf32>
    %8 = arith.addf %3, %7 : vector<32x32xf32>
    %c0_6 = arith.constant 0 : index
    %c0_7 = arith.constant 0 : index
    %9 = vector.load %arg7[%c0_6, %c0_7] : memref<32x32xf32, #tpu.memory_space<vmem>>, vector<32x32xf32>
    tpu.vector_store %arg7[%c0_6, %c0_7], %8 {strides = array<i32>} : memref<32x32xf32, #tpu.memory_space<vmem>>, vector<32x32xf32>,
    %c0_i32_8 = arith.constant 0 : i32
    %10 = arith.cmpi eq, %arg2, %c0_i32_8 : i32
    %11 = arith.extui %10 : i1 to i32
    %c0_i32_9 = arith.constant 0 : i32
    %12 = arith.cmpi ne, %11, %c0_i32_9 : i32
    scf.if %12 {
      %c0_10 = arith.constant 0 : index
      %c0_11 = arith.constant 0 : index
      %13 = vector.load %arg7[%c0_10, %c0_11] : memref<32x32xf32, #tpu.memory_space<vmem>>, vector<32x32xf32>
      %c0_12 = arith.constant 0 : index
      %c0_13 = arith.constant 0 : index
      %14 = vector.load %arg5[%c0_12, %c0_13] : memref<1x32xf32, #tpu.memory_space<vmem>>, vector<1x32xf32>
      %15 = vector.broadcast %14 : vector<1x32xf32> to vector<32x32xf32>
      %16 = arith.addf %13, %15 : vector<32x32xf32>
      %c0_14 = arith.constant 0 : index
      %c0_15 = arith.constant 0 : index
      %17 = vector.load %arg6[%c0_14, %c0_15] : memref<32x32xf32, #tpu.memory_space<vmem>>, vector<32x32xf32>
      tpu.vector_store %arg6[%c0_14, %c0_15], %16 {strides = array<i32>} : memref<32x32xf32, #tpu.memory_space<vmem>>, vector<32x32xf32>,
    } else {
    }
    return
  }
  func.func @transform_0(%arg0: i32, %arg1: i32, %arg2: i32) -> (i32, i32) {
    %c0_i32 = arith.constant 0 : i32
    return %arg0, %arg2 : i32, i32
  }
  func.func @transform_1(%arg0: i32, %arg1: i32, %arg2: i32) -> (i32, i32) {
    %c0_i32 = arith.constant 0 : i32
    return %arg2, %arg1 : i32, i32
  }
  func.func @transform_2(%arg0: i32, %arg1: i32, %arg2: i32) -> (i32, i32) {
    %c0_i32 = arith.constant 0 : i32
    %c0_i32_0 = arith.constant 0 : i32
    return %c0_i32, %arg1 : i32, i32
  }
  func.func @transform_3(%arg0: i32, %arg1: i32, %arg2: i32) -> (i32, i32) {
    %c0_i32 = arith.constant 0 : i32
    return %arg0, %arg1 : i32, i32
  }
}

module attributes {stable_mosaic.version = 11 : i64} {
  func.func @_ln_linear_kernel(%arg0: i32, %arg1: i32, %arg2: memref<34x32xf32, #tpu.memory_space<vmem>>, %arg3: memref<1x32xf32, #tpu.memory_space<vmem>>, %arg4: memref<1x32xf32, #tpu.memory_space<vmem>>, %arg5: memref<32x96xbf16, #tpu.memory_space<vmem>>, %arg6: memref<1x96xf32, #tpu.memory_space<vmem>>, %arg7: memref<34x96xbf16, #tpu.memory_space<vmem>>) attributes {dimension_semantics = [#tpu.dimension_semantics<parallel>, #tpu.dimension_semantics<parallel>], iteration_bounds = array<i64: 1, 1>, scalar_prefetch = 0 : i64, scratch_operands = 0 : i64, tpu.core_type = #tpu.core_type<tc>, window_params = [{transform_indices = @transform_0, window_bounds = array<i64: 34, 32>}, {pipeline_mode = #tpu.pipeline_mode<synchronous>, transform_indices = @transform_1, window_bounds = array<i64: 1, 32>}, {pipeline_mode = #tpu.pipeline_mode<synchronous>, transform_indices = @transform_2, window_bounds = array<i64: 1, 32>}, {transform_indices = @transform_3, window_bounds = array<i64: 32, 96>}, {transform_indices = @transform_4, window_bounds = array<i64: 1, 96>}, {transform_indices = @transform_5, window_bounds = array<i64: 34, 96>}]} {
    %c0 = arith.constant 0 : index
    %c0_0 = arith.constant 0 : index
    %0 = vector.load %arg2[%c0, %c0_0] : memref<34x32xf32, #tpu.memory_space<vmem>>, vector<34x32xf32>
    %cst = arith.constant dense<0.000000e+00> : vector<34xf32>
    %1 = vector.multi_reduction <add>, %0, %cst [1] : vector<34x32xf32> to vector<34xf32>
    %2 = vector.shape_cast %1 : vector<34xf32> to vector<34x1xf32>
    %cst_1 = arith.constant 3.200000e+01 : f32
    %3 = vector.broadcast %cst_1 : f32 to vector<34x1xf32>
    %4 = arith.divf %2, %3 : vector<34x1xf32>
    %5 = vector.broadcast %4 : vector<34x1xf32> to vector<34x32xf32>
    %6 = arith.subf %0, %5 : vector<34x32xf32>
    %7 = arith.mulf %6, %6 : vector<34x32xf32>
    %cst_2 = arith.constant dense<0.000000e+00> : vector<34xf32>
    %8 = vector.multi_reduction <add>, %7, %cst_2 [1] : vector<34x32xf32> to vector<34xf32>
    %9 = vector.shape_cast %8 : vector<34xf32> to vector<34x1xf32>
    %cst_3 = arith.constant 3.200000e+01 : f32
    %10 = vector.broadcast %cst_3 : f32 to vector<34x1xf32>
    %11 = arith.divf %9, %10 : vector<34x1xf32>
    %12 = vector.broadcast %4 : vector<34x1xf32> to vector<34x32xf32>
    %13 = arith.subf %0, %12 : vector<34x32xf32>
    %cst_4 = arith.constant 9.99999997E-7 : f32
    %14 = vector.broadcast %cst_4 : f32 to vector<34x1xf32>
    %15 = arith.addf %11, %14 : vector<34x1xf32>
    %16 = math.rsqrt %15 : vector<34x1xf32>
    %17 = vector.broadcast %16 : vector<34x1xf32> to vector<34x32xf32>
    %18 = arith.mulf %13, %17 : vector<34x32xf32>
    %c0_5 = arith.constant 0 : index
    %c0_6 = arith.constant 0 : index
    %19 = vector.load %arg3[%c0_5, %c0_6] : memref<1x32xf32, #tpu.memory_space<vmem>>, vector<1x32xf32>
    %20 = vector.broadcast %19 : vector<1x32xf32> to vector<34x32xf32>
    %21 = arith.mulf %18, %20 : vector<34x32xf32>
    %c0_7 = arith.constant 0 : index
    %c0_8 = arith.constant 0 : index
    %22 = vector.load %arg4[%c0_7, %c0_8] : memref<1x32xf32, #tpu.memory_space<vmem>>, vector<1x32xf32>
    %23 = vector.broadcast %22 : vector<1x32xf32> to vector<34x32xf32>
    %24 = arith.addf %21, %23 : vector<34x32xf32>
    %25 = arith.truncf %24 : vector<34x32xf32> to vector<34x32xbf16>
    %c0_9 = arith.constant 0 : index
    %c0_10 = arith.constant 0 : index
    %26 = vector.load %arg5[%c0_9, %c0_10] : memref<32x96xbf16, #tpu.memory_space<vmem>>, vector<32x96xbf16>
    %cst_11 = arith.constant dense<0.000000e+00> : vector<34x96xf32>
    %27 = tpu.matmul %25, %26, %cst_11 {dimension_numbers = #tpu.dot_dimension_numbers<[1], [0], [0], [1], [0, 0, 1, 1], [], []>} : vector<34x32xbf16>, vector<32x96xbf16>, vector<34x96xf32> -> vector<34x96xf32>
    %c0_12 = arith.constant 0 : index
    %c0_13 = arith.constant 0 : index
    %28 = vector.load %arg6[%c0_12, %c0_13] : memref<1x96xf32, #tpu.memory_space<vmem>>, vector<1x96xf32>
    %29 = vector.broadcast %28 : vector<1x96xf32> to vector<34x96xf32>
    %30 = arith.addf %27, %29 : vector<34x96xf32>
    %31 = arith.truncf %30 : vector<34x96xf32> to vector<34x96xbf16>
    %c0_14 = arith.constant 0 : index
    %c0_15 = arith.constant 0 : index
    %32 = vector.load %arg7[%c0_14, %c0_15] : memref<34x96xbf16, #tpu.memory_space<vmem>>, vector<34x96xbf16>
    tpu.vector_store %arg7[%c0_14, %c0_15], %31 {strides = array<i32>} : memref<34x96xbf16, #tpu.memory_space<vmem>>, vector<34x96xbf16>,
    return
  }
  func.func @transform_0(%arg0: i32, %arg1: i32) -> (i32, i32) {
    %c0_i32 = arith.constant 0 : i32
    %c0_i32_0 = arith.constant 0 : i32
    return %arg0, %c0_i32 : i32, i32
  }
  func.func @transform_1(%arg0: i32, %arg1: i32) -> (i32, i32) {
    %c0_i32 = arith.constant 0 : i32
    %c0_i32_0 = arith.constant 0 : i32
    %c0_i32_1 = arith.constant 0 : i32
    return %c0_i32, %c0_i32_0 : i32, i32
  }
  func.func @transform_2(%arg0: i32, %arg1: i32) -> (i32, i32) {
    %c0_i32 = arith.constant 0 : i32
    %c0_i32_0 = arith.constant 0 : i32
    %c0_i32_1 = arith.constant 0 : i32
    return %c0_i32, %c0_i32_0 : i32, i32
  }
  func.func @transform_3(%arg0: i32, %arg1: i32) -> (i32, i32) {
    %c0_i32 = arith.constant 0 : i32
    %c0_i32_0 = arith.constant 0 : i32
    return %c0_i32, %arg1 : i32, i32
  }
  func.func @transform_4(%arg0: i32, %arg1: i32) -> (i32, i32) {
    %c0_i32 = arith.constant 0 : i32
    %c0_i32_0 = arith.constant 0 : i32
    return %c0_i32, %arg1 : i32, i32
  }
  func.func @transform_5(%arg0: i32, %arg1: i32) -> (i32, i32) {
    %c0_i32 = arith.constant 0 : i32
    return %arg0, %arg1 : i32, i32
  }
}

module attributes {stable_mosaic.version = 11 : i64} {
  func.func @_attn_kernel(%arg0: i32, %arg1: memref<1x17x96xbf16, #tpu.memory_space<vmem>>, %arg2: memref<1x17x32xbf16, #tpu.memory_space<vmem>>) attributes {dimension_semantics = [#tpu.dimension_semantics<parallel>], iteration_bounds = array<i64: 2>, scalar_prefetch = 0 : i64, scratch_operands = 0 : i64, tpu.core_type = #tpu.core_type<tc>, window_params = [{transform_indices = @transform_0, window_bounds = array<i64: 1, 17, 96>}, {transform_indices = @transform_1, window_bounds = array<i64: 1, 17, 32>}]} {
    %c0 = arith.constant 0 : index
    %c0_0 = arith.constant 0 : index
    %c0_1 = arith.constant 0 : index
    %0 = vector.load %arg1[%c0, %c0_0, %c0_1] : memref<1x17x96xbf16, #tpu.memory_space<vmem>>, vector<1x17x96xbf16>
    %1 = vector.shape_cast %0 : vector<1x17x96xbf16> to vector<17x96xbf16>
    %2 = vector.extract_strided_slice %1 {offsets = [0, 0], sizes = [17, 8], strides = [1, 1]} : vector<17x96xbf16> to vector<17x8xbf16>
    %3 = arith.extf %2 : vector<17x8xbf16> to vector<17x8xf32>
    %cst = arith.constant 0.353553385 : f32
    %4 = vector.broadcast %cst : f32 to vector<17x8xf32>
    %5 = arith.mulf %3, %4 : vector<17x8xf32>
    %6 = arith.truncf %5 : vector<17x8xf32> to vector<17x8xbf16>
    %7 = vector.extract_strided_slice %1 {offsets = [0, 32], sizes = [17, 8], strides = [1, 1]} : vector<17x96xbf16> to vector<17x8xbf16>
    %8 = vector.extract_strided_slice %1 {offsets = [0, 64], sizes = [17, 8], strides = [1, 1]} : vector<17x96xbf16> to vector<17x8xbf16>
    %cst_2 = arith.constant dense<0.000000e+00> : vector<17x17xf32>
    %9 = tpu.matmul %6, %7, %cst_2 {dimension_numbers = #tpu.dot_dimension_numbers<[1], [1], [0], [0], [0, 0, 1, 0], [], []>} : vector<17x8xbf16>, vector<17x8xbf16>, vector<17x17xf32> -> vector<17x17xf32>
    %cst_3 = arith.constant dense<0xFF800000> : vector<17xf32>
    %10 = vector.multi_reduction <maximumf>, %9, %cst_3 [1] : vector<17x17xf32> to vector<17xf32>
    %11 = vector.shape_cast %10 : vector<17xf32> to vector<17x1xf32>
    %12 = vector.broadcast %11 : vector<17x1xf32> to vector<17x17xf32>
    %13 = arith.subf %9, %12 : vector<17x17xf32>
    %14 = math.exp %13 : vector<17x17xf32>
    %cst_4 = arith.constant dense<0.000000e+00> : vector<17xf32>
    %15 = vector.multi_reduction <add>, %14, %cst_4 [1] : vector<17x17xf32> to vector<17xf32>
    %16 = vector.shape_cast %15 : vector<17xf32> to vector<17x1xf32>
    %17 = tpu.reciprocal %16 {approx = true} : vector<17x1xf32> -> vector<17x1xf32>
    %18 = vector.broadcast %17 : vector<17x1xf32> to vector<17x17xf32>
    %19 = arith.mulf %14, %18 : vector<17x17xf32>
    %20 = arith.truncf %19 : vector<17x17xf32> to vector<17x17xbf16>
    %cst_5 = arith.constant dense<0.000000e+00> : vector<17x8xf32>
    %21 = tpu.matmul %20, %8, %cst_5 {dimension_numbers = #tpu.dot_dimension_numbers<[1], [0], [0], [1], [0, 0, 1, 1], [], []>} : vector<17x17xbf16>, vector<17x8xbf16>, vector<17x8xf32> -> vector<17x8xf32>
    %22 = vector.extract_strided_slice %1 {offsets = [0, 8], sizes = [17, 8], strides = [1, 1]} : vector<17x96xbf16> to vector<17x8xbf16>
    %23 = arith.extf %22 : vector<17x8xbf16> to vector<17x8xf32>
    %cst_6 = arith.constant 0.353553385 : f32
    %24 = vector.broadcast %cst_6 : f32 to vector<17x8xf32>
    %25 = arith.mulf %23, %24 : vector<17x8xf32>
    %26 = arith.truncf %25 : vector<17x8xf32> to vector<17x8xbf16>
    %27 = vector.extract_strided_slice %1 {offsets = [0, 40], sizes = [17, 8], strides = [1, 1]} : vector<17x96xbf16> to vector<17x8xbf16>
    %28 = vector.extract_strided_slice %1 {offsets = [0, 72], sizes = [17, 8], strides = [1, 1]} : vector<17x96xbf16> to vector<17x8xbf16>
    %cst_7 = arith.constant dense<0.000000e+00> : vector<17x17xf32>
    %29 = tpu.matmul %26, %27, %cst_7 {dimension_numbers = #tpu.dot_dimension_numbers<[1], [1], [0], [0], [0, 0, 1, 0], [], []>} : vector<17x8xbf16>, vector<17x8xbf16>, vector<17x17xf32> -> vector<17x17xf32>
    %cst_8 = arith.constant dense<0xFF800000> : vector<17xf32>
    %30 = vector.multi_reduction <maximumf>, %29, %cst_8 [1] : vector<17x17xf32> to vector<17xf32>
    %31 = vector.shape_cast %30 : vector<17xf32> to vector<17x1xf32>
    %32 = vector.broadcast %31 : vector<17x1xf32> to vector<17x17xf32>
    %33 = arith.subf %29, %32 : vector<17x17xf32>
    %34 = math.exp %33 : vector<17x17xf32>
    %cst_9 = arith.constant dense<0.000000e+00> : vector<17xf32>
    %35 = vector.multi_reduction <add>, %34, %cst_9 [1] : vector<17x17xf32> to vector<17xf32>
    %36 = vector.shape_cast %35 : vector<17xf32> to vector<17x1xf32>
    %37 = tpu.reciprocal %36 {approx = true} : vector<17x1xf32> -> vector<17x1xf32>
    %38 = vector.broadcast %37 : vector<17x1xf32> to vector<17x17xf32>
    %39 = arith.mulf %34, %38 : vector<17x17xf32>
    %40 = arith.truncf %39 : vector<17x17xf32> to vector<17x17xbf16>
    %cst_10 = arith.constant dense<0.000000e+00> : vector<17x8xf32>
    %41 = tpu.matmul %40, %28, %cst_10 {dimension_numbers = #tpu.dot_dimension_numbers<[1], [0], [0], [1], [0, 0, 1, 1], [], []>} : vector<17x17xbf16>, vector<17x8xbf16>, vector<17x8xf32> -> vector<17x8xf32>
    %42 = vector.extract_strided_slice %1 {offsets = [0, 16], sizes = [17, 8], strides = [1, 1]} : vector<17x96xbf16> to vector<17x8xbf16>
    %43 = arith.extf %42 : vector<17x8xbf16> to vector<17x8xf32>
    %cst_11 = arith.constant 0.353553385 : f32
    %44 = vector.broadcast %cst_11 : f32 to vector<17x8xf32>
    %45 = arith.mulf %43, %44 : vector<17x8xf32>
    %46 = arith.truncf %45 : vector<17x8xf32> to vector<17x8xbf16>
    %47 = vector.extract_strided_slice %1 {offsets = [0, 48], sizes = [17, 8], strides = [1, 1]} : vector<17x96xbf16> to vector<17x8xbf16>
    %48 = vector.extract_strided_slice %1 {offsets = [0, 80], sizes = [17, 8], strides = [1, 1]} : vector<17x96xbf16> to vector<17x8xbf16>
    %cst_12 = arith.constant dense<0.000000e+00> : vector<17x17xf32>
    %49 = tpu.matmul %46, %47, %cst_12 {dimension_numbers = #tpu.dot_dimension_numbers<[1], [1], [0], [0], [0, 0, 1, 0], [], []>} : vector<17x8xbf16>, vector<17x8xbf16>, vector<17x17xf32> -> vector<17x17xf32>
    %cst_13 = arith.constant dense<0xFF800000> : vector<17xf32>
    %50 = vector.multi_reduction <maximumf>, %49, %cst_13 [1] : vector<17x17xf32> to vector<17xf32>
    %51 = vector.shape_cast %50 : vector<17xf32> to vector<17x1xf32>
    %52 = vector.broadcast %51 : vector<17x1xf32> to vector<17x17xf32>
    %53 = arith.subf %49, %52 : vector<17x17xf32>
    %54 = math.exp %53 : vector<17x17xf32>
    %cst_14 = arith.constant dense<0.000000e+00> : vector<17xf32>
    %55 = vector.multi_reduction <add>, %54, %cst_14 [1] : vector<17x17xf32> to vector<17xf32>
    %56 = vector.shape_cast %55 : vector<17xf32> to vector<17x1xf32>
    %57 = tpu.reciprocal %56 {approx = true} : vector<17x1xf32> -> vector<17x1xf32>
    %58 = vector.broadcast %57 : vector<17x1xf32> to vector<17x17xf32>
    %59 = arith.mulf %54, %58 : vector<17x17xf32>
    %60 = arith.truncf %59 : vector<17x17xf32> to vector<17x17xbf16>
    %cst_15 = arith.constant dense<0.000000e+00> : vector<17x8xf32>
    %61 = tpu.matmul %60, %48, %cst_15 {dimension_numbers = #tpu.dot_dimension_numbers<[1], [0], [0], [1], [0, 0, 1, 1], [], []>} : vector<17x17xbf16>, vector<17x8xbf16>, vector<17x8xf32> -> vector<17x8xf32>
    %62 = vector.extract_strided_slice %1 {offsets = [0, 24], sizes = [17, 8], strides = [1, 1]} : vector<17x96xbf16> to vector<17x8xbf16>
    %63 = arith.extf %62 : vector<17x8xbf16> to vector<17x8xf32>
    %cst_16 = arith.constant 0.353553385 : f32
    %64 = vector.broadcast %cst_16 : f32 to vector<17x8xf32>
    %65 = arith.mulf %63, %64 : vector<17x8xf32>
    %66 = arith.truncf %65 : vector<17x8xf32> to vector<17x8xbf16>
    %67 = vector.extract_strided_slice %1 {offsets = [0, 56], sizes = [17, 8], strides = [1, 1]} : vector<17x96xbf16> to vector<17x8xbf16>
    %68 = vector.extract_strided_slice %1 {offsets = [0, 88], sizes = [17, 8], strides = [1, 1]} : vector<17x96xbf16> to vector<17x8xbf16>
    %cst_17 = arith.constant dense<0.000000e+00> : vector<17x17xf32>
    %69 = tpu.matmul %66, %67, %cst_17 {dimension_numbers = #tpu.dot_dimension_numbers<[1], [1], [0], [0], [0, 0, 1, 0], [], []>} : vector<17x8xbf16>, vector<17x8xbf16>, vector<17x17xf32> -> vector<17x17xf32>
    %cst_18 = arith.constant dense<0xFF800000> : vector<17xf32>
    %70 = vector.multi_reduction <maximumf>, %69, %cst_18 [1] : vector<17x17xf32> to vector<17xf32>
    %71 = vector.shape_cast %70 : vector<17xf32> to vector<17x1xf32>
    %72 = vector.broadcast %71 : vector<17x1xf32> to vector<17x17xf32>
    %73 = arith.subf %69, %72 : vector<17x17xf32>
    %74 = math.exp %73 : vector<17x17xf32>
    %cst_19 = arith.constant dense<0.000000e+00> : vector<17xf32>
    %75 = vector.multi_reduction <add>, %74, %cst_19 [1] : vector<17x17xf32> to vector<17xf32>
    %76 = vector.shape_cast %75 : vector<17xf32> to vector<17x1xf32>
    %77 = tpu.reciprocal %76 {approx = true} : vector<17x1xf32> -> vector<17x1xf32>
    %78 = vector.broadcast %77 : vector<17x1xf32> to vector<17x17xf32>
    %79 = arith.mulf %74, %78 : vector<17x17xf32>
    %80 = arith.truncf %79 : vector<17x17xf32> to vector<17x17xbf16>
    %cst_20 = arith.constant dense<0.000000e+00> : vector<17x8xf32>
    %81 = tpu.matmul %80, %68, %cst_20 {dimension_numbers = #tpu.dot_dimension_numbers<[1], [0], [0], [1], [0, 0, 1, 1], [], []>} : vector<17x17xbf16>, vector<17x8xbf16>, vector<17x8xf32> -> vector<17x8xf32>
    %82 = tpu.concatenate %21, %41, %61, %81 in 1 : vector<17x8xf32>, vector<17x8xf32>, vector<17x8xf32>, vector<17x8xf32> -> vector<17x32xf32>
    %83 = arith.truncf %82 : vector<17x32xf32> to vector<17x32xbf16>
    %c0_21 = arith.constant 0 : index
    %c0_22 = arith.constant 0 : index
    %c0_23 = arith.constant 0 : index
    %84 = vector.load %arg2[%c0_21, %c0_22, %c0_23] : memref<1x17x32xbf16, #tpu.memory_space<vmem>>, vector<1x17x32xbf16>
    %85 = vector.shape_cast %84 : vector<1x17x32xbf16> to vector<17x32xbf16>
    %86 = vector.shape_cast %83 : vector<17x32xbf16> to vector<1x17x32xbf16>
    tpu.vector_store %arg2[%c0_21, %c0_22, %c0_23], %86 {strides = array<i32>} : memref<1x17x32xbf16, #tpu.memory_space<vmem>>, vector<1x17x32xbf16>,
    return
  }
  func.func @transform_0(%arg0: i32) -> (i32, i32, i32) {
    %c0_i32 = arith.constant 0 : i32
    %c0_i32_0 = arith.constant 0 : i32
    %c0_i32_1 = arith.constant 0 : i32
    return %arg0, %c0_i32, %c0_i32_0 : i32, i32, i32
  }
  func.func @transform_1(%arg0: i32) -> (i32, i32, i32) {
    %c0_i32 = arith.constant 0 : i32
    %c0_i32_0 = arith.constant 0 : i32
    %c0_i32_1 = arith.constant 0 : i32
    return %arg0, %c0_i32, %c0_i32_0 : i32, i32, i32
  }
}

module attributes {stable_mosaic.version = 11 : i64} {
  func.func @_matmul_kernel(%arg0: i32, %arg1: i32, %arg2: i32, %arg3: memref<34x32xbf16, #tpu.memory_space<vmem>>, %arg4: memref<32x32xbf16, #tpu.memory_space<vmem>>, %arg5: memref<1x32xf32, #tpu.memory_space<vmem>>, %arg6: memref<34x32xf32, #tpu.memory_space<vmem>>, %arg7: memref<34x32xf32, #tpu.memory_space<vmem>>, %arg8: memref<34x32xf32, #tpu.memory_space<vmem>>) attributes {dimension_semantics = [#tpu.dimension_semantics<parallel>, #tpu.dimension_semantics<parallel>, #tpu.dimension_semantics<arbitrary>], iteration_bounds = array<i64: 1, 1, 1>, scalar_prefetch = 0 : i64, scratch_operands = 1 : i64, tpu.core_type = #tpu.core_type<tc>, window_params = [{transform_indices = @transform_0, window_bounds = array<i64: 34, 32>}, {transform_indices = @transform_1, window_bounds = array<i64: 32, 32>}, {transform_indices = @transform_2, window_bounds = array<i64: 1, 32>}, {transform_indices = @transform_3, window_bounds = array<i64: 34, 32>}, {transform_indices = @transform_4, window_bounds = array<i64: 34, 32>}]} {
    %c0_i32 = arith.constant 0 : i32
    %0 = arith.cmpi eq, %arg2, %c0_i32 : i32
    %1 = arith.extui %0 : i1 to i32
    %c0_i32_0 = arith.constant 0 : i32
    %2 = arith.cmpi ne, %1, %c0_i32_0 : i32
    scf.if %2 {
      %cst_10 = arith.constant 0.000000e+00 : f32
      %12 = vector.broadcast %cst_10 : f32 to vector<34x32xf32>
      %c0_11 = arith.constant 0 : index
      %c0_12 = arith.constant 0 : index
      %13 = vector.load %arg8[%c0_11, %c0_12] : memref<34x32xf32, #tpu.memory_space<vmem>>, vector<34x32xf32>
      tpu.vector_store %arg8[%c0_11, %c0_12], %12 {strides = array<i32>} : memref<34x32xf32, #tpu.memory_space<vmem>>, vector<34x32xf32>,
    } else {
    }
    %c0 = arith.constant 0 : index
    %c0_1 = arith.constant 0 : index
    %3 = vector.load %arg8[%c0, %c0_1] : memref<34x32xf32, #tpu.memory_space<vmem>>, vector<34x32xf32>
    %c0_2 = arith.constant 0 : index
    %c0_3 = arith.constant 0 : index
    %4 = vector.load %arg3[%c0_2, %c0_3] : memref<34x32xbf16, #tpu.memory_space<vmem>>, vector<34x32xbf16>
    %c0_4 = arith.constant 0 : index
    %c0_5 = arith.constant 0 : index
    %5 = vector.load %arg4[%c0_4, %c0_5] : memref<32x32xbf16, #tpu.memory_space<vmem>>, vector<32x32xbf16>
    %cst = arith.constant dense<0.000000e+00> : vector<34x32xf32>
    %6 = tpu.matmul %4, %5, %cst {dimension_numbers = #tpu.dot_dimension_numbers<[1], [0], [0], [1], [0, 0, 1, 1], [], []>} : vector<34x32xbf16>, vector<32x32xbf16>, vector<34x32xf32> -> vector<34x32xf32>
    %7 = arith.addf %3, %6 : vector<34x32xf32>
    %c0_6 = arith.constant 0 : index
    %c0_7 = arith.constant 0 : index
    %8 = vector.load %arg8[%c0_6, %c0_7] : memref<34x32xf32, #tpu.memory_space<vmem>>, vector<34x32xf32>
    tpu.vector_store %arg8[%c0_6, %c0_7], %7 {strides = array<i32>} : memref<34x32xf32, #tpu.memory_space<vmem>>, vector<34x32xf32>,
    %c0_i32_8 = arith.constant 0 : i32
    %9 = arith.cmpi eq, %arg2, %c0_i32_8 : i32
    %10 = arith.extui %9 : i1 to i32
    %c0_i32_9 = arith.constant 0 : i32
    %11 = arith.cmpi ne, %10, %c0_i32_9 : i32
    scf.if %11 {
      %c0_10 = arith.constant 0 : index
      %c0_11 = arith.constant 0 : index
      %12 = vector.load %arg8[%c0_10, %c0_11] : memref<34x32xf32, #tpu.memory_space<vmem>>, vector<34x32xf32>
      %c0_12 = arith.constant 0 : index
      %c0_13 = arith.constant 0 : index
      %13 = vector.load %arg5[%c0_12, %c0_13] : memref<1x32xf32, #tpu.memory_space<vmem>>, vector<1x32xf32>
      %14 = vector.broadcast %13 : vector<1x32xf32> to vector<34x32xf32>
      %15 = arith.addf %12, %14 : vector<34x32xf32>
      %c0_14 = arith.constant 0 : index
      %c0_15 = arith.constant 0 : index
      %16 = vector.load %arg6[%c0_14, %c0_15] : memref<34x32xf32, #tpu.memory_space<vmem>>, vector<34x32xf32>
      %17 = arith.addf %15, %16 : vector<34x32xf32>
      %c0_16 = arith.constant 0 : index
      %c0_17 = arith.constant 0 : index
      %18 = vector.load %arg7[%c0_16, %c0_17] : memref<34x32xf32, #tpu.memory_space<vmem>>, vector<34x32xf32>
      tpu.vector_store %arg7[%c0_16, %c0_17], %17 {strides = array<i32>} : memref<34x32xf32, #tpu.memory_space<vmem>>, vector<34x32xf32>,
    } else {
    }
    return
  }
  func.func @transform_0(%arg0: i32, %arg1: i32, %arg2: i32) -> (i32, i32) {
    %c0_i32 = arith.constant 0 : i32
    return %arg0, %arg2 : i32, i32
  }
  func.func @transform_1(%arg0: i32, %arg1: i32, %arg2: i32) -> (i32, i32) {
    %c0_i32 = arith.constant 0 : i32
    return %arg2, %arg1 : i32, i32
  }
  func.func @transform_2(%arg0: i32, %arg1: i32, %arg2: i32) -> (i32, i32) {
    %c0_i32 = arith.constant 0 : i32
    %c0_i32_0 = arith.constant 0 : i32
    return %c0_i32, %arg1 : i32, i32
  }
  func.func @transform_3(%arg0: i32, %arg1: i32, %arg2: i32) -> (i32, i32) {
    %c0_i32 = arith.constant 0 : i32
    return %arg0, %arg1 : i32, i32
  }
  func.func @transform_4(%arg0: i32, %arg1: i32, %arg2: i32) -> (i32, i32) {
    %c0_i32 = arith.constant 0 : i32
    return %arg0, %arg1 : i32, i32
  }
}

module attributes {stable_mosaic.version = 11 : i64} {
  func.func @_ln_linear_kernel(%arg0: i32, %arg1: i32, %arg2: memref<34x32xf32, #tpu.memory_space<vmem>>, %arg3: memref<1x32xf32, #tpu.memory_space<vmem>>, %arg4: memref<1x32xf32, #tpu.memory_space<vmem>>, %arg5: memref<32x64xbf16, #tpu.memory_space<vmem>>, %arg6: memref<1x64xf32, #tpu.memory_space<vmem>>, %arg7: memref<34x64xbf16, #tpu.memory_space<vmem>>) attributes {dimension_semantics = [#tpu.dimension_semantics<parallel>, #tpu.dimension_semantics<parallel>], iteration_bounds = array<i64: 1, 1>, scalar_prefetch = 0 : i64, scratch_operands = 0 : i64, tpu.core_type = #tpu.core_type<tc>, window_params = [{transform_indices = @transform_0, window_bounds = array<i64: 34, 32>}, {pipeline_mode = #tpu.pipeline_mode<synchronous>, transform_indices = @transform_1, window_bounds = array<i64: 1, 32>}, {pipeline_mode = #tpu.pipeline_mode<synchronous>, transform_indices = @transform_2, window_bounds = array<i64: 1, 32>}, {transform_indices = @transform_3, window_bounds = array<i64: 32, 64>}, {transform_indices = @transform_4, window_bounds = array<i64: 1, 64>}, {transform_indices = @transform_5, window_bounds = array<i64: 34, 64>}]} {
    %c0 = arith.constant 0 : index
    %c0_0 = arith.constant 0 : index
    %0 = vector.load %arg2[%c0, %c0_0] : memref<34x32xf32, #tpu.memory_space<vmem>>, vector<34x32xf32>
    %cst = arith.constant dense<0.000000e+00> : vector<34xf32>
    %1 = vector.multi_reduction <add>, %0, %cst [1] : vector<34x32xf32> to vector<34xf32>
    %2 = vector.shape_cast %1 : vector<34xf32> to vector<34x1xf32>
    %cst_1 = arith.constant 3.200000e+01 : f32
    %3 = vector.broadcast %cst_1 : f32 to vector<34x1xf32>
    %4 = arith.divf %2, %3 : vector<34x1xf32>
    %5 = vector.broadcast %4 : vector<34x1xf32> to vector<34x32xf32>
    %6 = arith.subf %0, %5 : vector<34x32xf32>
    %7 = arith.mulf %6, %6 : vector<34x32xf32>
    %cst_2 = arith.constant dense<0.000000e+00> : vector<34xf32>
    %8 = vector.multi_reduction <add>, %7, %cst_2 [1] : vector<34x32xf32> to vector<34xf32>
    %9 = vector.shape_cast %8 : vector<34xf32> to vector<34x1xf32>
    %cst_3 = arith.constant 3.200000e+01 : f32
    %10 = vector.broadcast %cst_3 : f32 to vector<34x1xf32>
    %11 = arith.divf %9, %10 : vector<34x1xf32>
    %12 = vector.broadcast %4 : vector<34x1xf32> to vector<34x32xf32>
    %13 = arith.subf %0, %12 : vector<34x32xf32>
    %cst_4 = arith.constant 9.99999997E-7 : f32
    %14 = vector.broadcast %cst_4 : f32 to vector<34x1xf32>
    %15 = arith.addf %11, %14 : vector<34x1xf32>
    %16 = math.rsqrt %15 : vector<34x1xf32>
    %17 = vector.broadcast %16 : vector<34x1xf32> to vector<34x32xf32>
    %18 = arith.mulf %13, %17 : vector<34x32xf32>
    %c0_5 = arith.constant 0 : index
    %c0_6 = arith.constant 0 : index
    %19 = vector.load %arg3[%c0_5, %c0_6] : memref<1x32xf32, #tpu.memory_space<vmem>>, vector<1x32xf32>
    %20 = vector.broadcast %19 : vector<1x32xf32> to vector<34x32xf32>
    %21 = arith.mulf %18, %20 : vector<34x32xf32>
    %c0_7 = arith.constant 0 : index
    %c0_8 = arith.constant 0 : index
    %22 = vector.load %arg4[%c0_7, %c0_8] : memref<1x32xf32, #tpu.memory_space<vmem>>, vector<1x32xf32>
    %23 = vector.broadcast %22 : vector<1x32xf32> to vector<34x32xf32>
    %24 = arith.addf %21, %23 : vector<34x32xf32>
    %25 = arith.truncf %24 : vector<34x32xf32> to vector<34x32xbf16>
    %c0_9 = arith.constant 0 : index
    %c0_10 = arith.constant 0 : index
    %26 = vector.load %arg5[%c0_9, %c0_10] : memref<32x64xbf16, #tpu.memory_space<vmem>>, vector<32x64xbf16>
    %cst_11 = arith.constant dense<0.000000e+00> : vector<34x64xf32>
    %27 = tpu.matmul %25, %26, %cst_11 {dimension_numbers = #tpu.dot_dimension_numbers<[1], [0], [0], [1], [0, 0, 1, 1], [], []>} : vector<34x32xbf16>, vector<32x64xbf16>, vector<34x64xf32> -> vector<34x64xf32>
    %c0_12 = arith.constant 0 : index
    %c0_13 = arith.constant 0 : index
    %28 = vector.load %arg6[%c0_12, %c0_13] : memref<1x64xf32, #tpu.memory_space<vmem>>, vector<1x64xf32>
    %29 = vector.broadcast %28 : vector<1x64xf32> to vector<34x64xf32>
    %30 = arith.addf %27, %29 : vector<34x64xf32>
    %31 = arith.mulf %30, %30 : vector<34x64xf32>
    %32 = arith.mulf %30, %31 : vector<34x64xf32>
    %cst_14 = arith.constant 4.471500e-02 : f32
    %33 = vector.broadcast %cst_14 : f32 to vector<34x64xf32>
    %34 = arith.mulf %33, %32 : vector<34x64xf32>
    %35 = arith.addf %30, %34 : vector<34x64xf32>
    %cst_15 = arith.constant 0.797884583 : f32
    %36 = vector.broadcast %cst_15 : f32 to vector<34x64xf32>
    %37 = arith.mulf %36, %35 : vector<34x64xf32>
    %38 = math.tanh %37 : vector<34x64xf32>
    %cst_16 = arith.constant 1.000000e+00 : f32
    %39 = vector.broadcast %cst_16 : f32 to vector<34x64xf32>
    %40 = arith.addf %39, %38 : vector<34x64xf32>
    %cst_17 = arith.constant 5.000000e-01 : f32
    %41 = vector.broadcast %cst_17 : f32 to vector<34x64xf32>
    %42 = arith.mulf %41, %40 : vector<34x64xf32>
    %43 = arith.mulf %30, %42 : vector<34x64xf32>
    %44 = arith.truncf %43 : vector<34x64xf32> to vector<34x64xbf16>
    %c0_18 = arith.constant 0 : index
    %c0_19 = arith.constant 0 : index
    %45 = vector.load %arg7[%c0_18, %c0_19] : memref<34x64xbf16, #tpu.memory_space<vmem>>, vector<34x64xbf16>
    tpu.vector_store %arg7[%c0_18, %c0_19], %44 {strides = array<i32>} : memref<34x64xbf16, #tpu.memory_space<vmem>>, vector<34x64xbf16>,
    return
  }
  func.func @transform_0(%arg0: i32, %arg1: i32) -> (i32, i32) {
    %c0_i32 = arith.constant 0 : i32
    %c0_i32_0 = arith.constant 0 : i32
    return %arg0, %c0_i32 : i32, i32
  }
  func.func @transform_1(%arg0: i32, %arg1: i32) -> (i32, i32) {
    %c0_i32 = arith.constant 0 : i32
    %c0_i32_0 = arith.constant 0 : i32
    %c0_i32_1 = arith.constant 0 : i32
    return %c0_i32, %c0_i32_0 : i32, i32
  }
  func.func @transform_2(%arg0: i32, %arg1: i32) -> (i32, i32) {
    %c0_i32 = arith.constant 0 : i32
    %c0_i32_0 = arith.constant 0 : i32
    %c0_i32_1 = arith.constant 0 : i32
    return %c0_i32, %c0_i32_0 : i32, i32
  }
  func.func @transform_3(%arg0: i32, %arg1: i32) -> (i32, i32) {
    %c0_i32 = arith.constant 0 : i32
    %c0_i32_0 = arith.constant 0 : i32
    return %c0_i32, %arg1 : i32, i32
  }
  func.func @transform_4(%arg0: i32, %arg1: i32) -> (i32, i32) {
    %c0_i32 = arith.constant 0 : i32
    %c0_i32_0 = arith.constant 0 : i32
    return %c0_i32, %arg1 : i32, i32
  }
  func.func @transform_5(%arg0: i32, %arg1: i32) -> (i32, i32) {
    %c0_i32 = arith.constant 0 : i32
    return %arg0, %arg1 : i32, i32
  }
}

module attributes {stable_mosaic.version = 11 : i64} {
  func.func @_matmul_kernel(%arg0: i32, %arg1: i32, %arg2: i32, %arg3: memref<34x64xbf16, #tpu.memory_space<vmem>>, %arg4: memref<64x32xbf16, #tpu.memory_space<vmem>>, %arg5: memref<1x32xf32, #tpu.memory_space<vmem>>, %arg6: memref<34x32xf32, #tpu.memory_space<vmem>>, %arg7: memref<34x32xf32, #tpu.memory_space<vmem>>, %arg8: memref<34x32xf32, #tpu.memory_space<vmem>>) attributes {dimension_semantics = [#tpu.dimension_semantics<parallel>, #tpu.dimension_semantics<parallel>, #tpu.dimension_semantics<arbitrary>], iteration_bounds = array<i64: 1, 1, 1>, scalar_prefetch = 0 : i64, scratch_operands = 1 : i64, tpu.core_type = #tpu.core_type<tc>, window_params = [{transform_indices = @transform_0, window_bounds = array<i64: 34, 64>}, {transform_indices = @transform_1, window_bounds = array<i64: 64, 32>}, {transform_indices = @transform_2, window_bounds = array<i64: 1, 32>}, {transform_indices = @transform_3, window_bounds = array<i64: 34, 32>}, {transform_indices = @transform_4, window_bounds = array<i64: 34, 32>}]} {
    %c0_i32 = arith.constant 0 : i32
    %0 = arith.cmpi eq, %arg2, %c0_i32 : i32
    %1 = arith.extui %0 : i1 to i32
    %c0_i32_0 = arith.constant 0 : i32
    %2 = arith.cmpi ne, %1, %c0_i32_0 : i32
    scf.if %2 {
      %cst_10 = arith.constant 0.000000e+00 : f32
      %12 = vector.broadcast %cst_10 : f32 to vector<34x32xf32>
      %c0_11 = arith.constant 0 : index
      %c0_12 = arith.constant 0 : index
      %13 = vector.load %arg8[%c0_11, %c0_12] : memref<34x32xf32, #tpu.memory_space<vmem>>, vector<34x32xf32>
      tpu.vector_store %arg8[%c0_11, %c0_12], %12 {strides = array<i32>} : memref<34x32xf32, #tpu.memory_space<vmem>>, vector<34x32xf32>,
    } else {
    }
    %c0 = arith.constant 0 : index
    %c0_1 = arith.constant 0 : index
    %3 = vector.load %arg8[%c0, %c0_1] : memref<34x32xf32, #tpu.memory_space<vmem>>, vector<34x32xf32>
    %c0_2 = arith.constant 0 : index
    %c0_3 = arith.constant 0 : index
    %4 = vector.load %arg3[%c0_2, %c0_3] : memref<34x64xbf16, #tpu.memory_space<vmem>>, vector<34x64xbf16>
    %c0_4 = arith.constant 0 : index
    %c0_5 = arith.constant 0 : index
    %5 = vector.load %arg4[%c0_4, %c0_5] : memref<64x32xbf16, #tpu.memory_space<vmem>>, vector<64x32xbf16>
    %cst = arith.constant dense<0.000000e+00> : vector<34x32xf32>
    %6 = tpu.matmul %4, %5, %cst {dimension_numbers = #tpu.dot_dimension_numbers<[1], [0], [0], [1], [0, 0, 1, 1], [], []>} : vector<34x64xbf16>, vector<64x32xbf16>, vector<34x32xf32> -> vector<34x32xf32>
    %7 = arith.addf %3, %6 : vector<34x32xf32>
    %c0_6 = arith.constant 0 : index
    %c0_7 = arith.constant 0 : index
    %8 = vector.load %arg8[%c0_6, %c0_7] : memref<34x32xf32, #tpu.memory_space<vmem>>, vector<34x32xf32>
    tpu.vector_store %arg8[%c0_6, %c0_7], %7 {strides = array<i32>} : memref<34x32xf32, #tpu.memory_space<vmem>>, vector<34x32xf32>,
    %c0_i32_8 = arith.constant 0 : i32
    %9 = arith.cmpi eq, %arg2, %c0_i32_8 : i32
    %10 = arith.extui %9 : i1 to i32
    %c0_i32_9 = arith.constant 0 : i32
    %11 = arith.cmpi ne, %10, %c0_i32_9 : i32
    scf.if %11 {
      %c0_10 = arith.constant 0 : index
      %c0_11 = arith.constant 0 : index
      %12 = vector.load %arg8[%c0_10, %c0_11] : memref<34x32xf32, #tpu.memory_space<vmem>>, vector<34x32xf32>
      %c0_12 = arith.constant 0 : index
      %c0_13 = arith.constant 0 : index
      %13 = vector.load %arg5[%c0_12, %c0_13] : memref<1x32xf32, #tpu.memory_space<vmem>>, vector<1x32xf32>
      %14 = vector.broadcast %13 : vector<1x32xf32> to vector<34x32xf32>
      %15 = arith.addf %12, %14 : vector<34x32xf32>
      %c0_14 = arith.constant 0 : index
      %c0_15 = arith.constant 0 : index
      %16 = vector.load %arg6[%c0_14, %c0_15] : memref<34x32xf32, #tpu.memory_space<vmem>>, vector<34x32xf32>
      %17 = arith.addf %15, %16 : vector<34x32xf32>
      %c0_16 = arith.constant 0 : index
      %c0_17 = arith.constant 0 : index
      %18 = vector.load %arg7[%c0_16, %c0_17] : memref<34x32xf32, #tpu.memory_space<vmem>>, vector<34x32xf32>
      tpu.vector_store %arg7[%c0_16, %c0_17], %17 {strides = array<i32>} : memref<34x32xf32, #tpu.memory_space<vmem>>, vector<34x32xf32>,
    } else {
    }
    return
  }
  func.func @transform_0(%arg0: i32, %arg1: i32, %arg2: i32) -> (i32, i32) {
    %c0_i32 = arith.constant 0 : i32
    return %arg0, %arg2 : i32, i32
  }
  func.func @transform_1(%arg0: i32, %arg1: i32, %arg2: i32) -> (i32, i32) {
    %c0_i32 = arith.constant 0 : i32
    return %arg2, %arg1 : i32, i32
  }
  func.func @transform_2(%arg0: i32, %arg1: i32, %arg2: i32) -> (i32, i32) {
    %c0_i32 = arith.constant 0 : i32
    %c0_i32_0 = arith.constant 0 : i32
    return %c0_i32, %arg1 : i32, i32
  }
  func.func @transform_3(%arg0: i32, %arg1: i32, %arg2: i32) -> (i32, i32) {
    %c0_i32 = arith.constant 0 : i32
    return %arg0, %arg1 : i32, i32
  }
  func.func @transform_4(%arg0: i32, %arg1: i32, %arg2: i32) -> (i32, i32) {
    %c0_i32 = arith.constant 0 : i32
    return %arg0, %arg1 : i32, i32
  }
}

module attributes {stable_mosaic.version = 11 : i64} {
  func.func @_ln_linear_kernel(%arg0: i32, %arg1: i32, %arg2: memref<2x32xf32, #tpu.memory_space<vmem>>, %arg3: memref<1x32xf32, #tpu.memory_space<vmem>>, %arg4: memref<1x32xf32, #tpu.memory_space<vmem>>, %arg5: memref<32x10xbf16, #tpu.memory_space<vmem>>, %arg6: memref<1x10xf32, #tpu.memory_space<vmem>>, %arg7: memref<2x10xf32, #tpu.memory_space<vmem>>) attributes {dimension_semantics = [#tpu.dimension_semantics<parallel>, #tpu.dimension_semantics<parallel>], iteration_bounds = array<i64: 1, 1>, scalar_prefetch = 0 : i64, scratch_operands = 0 : i64, tpu.core_type = #tpu.core_type<tc>, window_params = [{transform_indices = @transform_0, window_bounds = array<i64: 2, 32>}, {pipeline_mode = #tpu.pipeline_mode<synchronous>, transform_indices = @transform_1, window_bounds = array<i64: 1, 32>}, {pipeline_mode = #tpu.pipeline_mode<synchronous>, transform_indices = @transform_2, window_bounds = array<i64: 1, 32>}, {transform_indices = @transform_3, window_bounds = array<i64: 32, 10>}, {transform_indices = @transform_4, window_bounds = array<i64: 1, 10>}, {transform_indices = @transform_5, window_bounds = array<i64: 2, 10>}]} {
    %c0 = arith.constant 0 : index
    %c0_0 = arith.constant 0 : index
    %0 = vector.load %arg2[%c0, %c0_0] : memref<2x32xf32, #tpu.memory_space<vmem>>, vector<2x32xf32>
    %cst = arith.constant dense<0.000000e+00> : vector<2xf32>
    %1 = vector.multi_reduction <add>, %0, %cst [1] : vector<2x32xf32> to vector<2xf32>
    %2 = vector.shape_cast %1 : vector<2xf32> to vector<2x1xf32>
    %cst_1 = arith.constant 3.200000e+01 : f32
    %3 = vector.broadcast %cst_1 : f32 to vector<2x1xf32>
    %4 = arith.divf %2, %3 : vector<2x1xf32>
    %5 = vector.broadcast %4 : vector<2x1xf32> to vector<2x32xf32>
    %6 = arith.subf %0, %5 : vector<2x32xf32>
    %7 = arith.mulf %6, %6 : vector<2x32xf32>
    %cst_2 = arith.constant dense<0.000000e+00> : vector<2xf32>
    %8 = vector.multi_reduction <add>, %7, %cst_2 [1] : vector<2x32xf32> to vector<2xf32>
    %9 = vector.shape_cast %8 : vector<2xf32> to vector<2x1xf32>
    %cst_3 = arith.constant 3.200000e+01 : f32
    %10 = vector.broadcast %cst_3 : f32 to vector<2x1xf32>
    %11 = arith.divf %9, %10 : vector<2x1xf32>
    %12 = vector.broadcast %4 : vector<2x1xf32> to vector<2x32xf32>
    %13 = arith.subf %0, %12 : vector<2x32xf32>
    %cst_4 = arith.constant 9.99999997E-7 : f32
    %14 = vector.broadcast %cst_4 : f32 to vector<2x1xf32>
    %15 = arith.addf %11, %14 : vector<2x1xf32>
    %16 = math.rsqrt %15 : vector<2x1xf32>
    %17 = vector.broadcast %16 : vector<2x1xf32> to vector<2x32xf32>
    %18 = arith.mulf %13, %17 : vector<2x32xf32>
    %c0_5 = arith.constant 0 : index
    %c0_6 = arith.constant 0 : index
    %19 = vector.load %arg3[%c0_5, %c0_6] : memref<1x32xf32, #tpu.memory_space<vmem>>, vector<1x32xf32>
    %20 = vector.broadcast %19 : vector<1x32xf32> to vector<2x32xf32>
    %21 = arith.mulf %18, %20 : vector<2x32xf32>
    %c0_7 = arith.constant 0 : index
    %c0_8 = arith.constant 0 : index
    %22 = vector.load %arg4[%c0_7, %c0_8] : memref<1x32xf32, #tpu.memory_space<vmem>>, vector<1x32xf32>
    %23 = vector.broadcast %22 : vector<1x32xf32> to vector<2x32xf32>
    %24 = arith.addf %21, %23 : vector<2x32xf32>
    %25 = arith.truncf %24 : vector<2x32xf32> to vector<2x32xbf16>
    %c0_9 = arith.constant 0 : index
    %c0_10 = arith.constant 0 : index
    %26 = vector.load %arg5[%c0_9, %c0_10] : memref<32x10xbf16, #tpu.memory_space<vmem>>, vector<32x10xbf16>
    %cst_11 = arith.constant dense<0.000000e+00> : vector<2x10xf32>
    %27 = tpu.matmul %25, %26, %cst_11 {dimension_numbers = #tpu.dot_dimension_numbers<[1], [0], [0], [1], [0, 0, 1, 1], [], []>} : vector<2x32xbf16>, vector<32x10xbf16>, vector<2x10xf32> -> vector<2x10xf32>
    %c0_12 = arith.constant 0 : index
    %c0_13 = arith.constant 0 : index
    %28 = vector.load %arg6[%c0_12, %c0_13] : memref<1x10xf32, #tpu.memory_space<vmem>>, vector<1x10xf32>
    %29 = vector.broadcast %28 : vector<1x10xf32> to vector<2x10xf32>
    %30 = arith.addf %27, %29 : vector<2x10xf32>
    %c0_14 = arith.constant 0 : index
    %c0_15 = arith.constant 0 : index
    %31 = vector.load %arg7[%c0_14, %c0_15] : memref<2x10xf32, #tpu.memory_space<vmem>>, vector<2x10xf32>
    tpu.vector_store %arg7[%c0_14, %c0_15], %30 {strides = array<i32>} : memref<2x10xf32, #tpu.memory_space<vmem>>, vector<2x10xf32>,
    return
  }
  func.func @transform_0(%arg0: i32, %arg1: i32) -> (i32, i32) {
    %c0_i32 = arith.constant 0 : i32
    %c0_i32_0 = arith.constant 0 : i32
    return %arg0, %c0_i32 : i32, i32
  }
  func.func @transform_1(%arg0: i32, %arg1: i32) -> (i32, i32) {
    %c0_i32 = arith.constant 0 : i32
    %c0_i32_0 = arith.constant 0 : i32
    %c0_i32_1 = arith.constant 0 : i32
    return %c0_i32, %c0_i32_0 : i32, i32
  }
  func.func @transform_2(%arg0: i32, %arg1: i32) -> (i32, i32) {
    %c0_i32 = arith.constant 0 : i32
    %c0_i32_0 = arith.constant 0 : i32
    %c0_i32_1 = arith.constant 0 : i32
    return %c0_i32, %c0_i32_0 : i32, i32
  }
  func.func @transform_3(%arg0: i32, %arg1: i32) -> (i32, i32) {
    %c0_i32 = arith.constant 0 : i32
    %c0_i32_0 = arith.constant 0 : i32
    return %c0_i32, %arg1 : i32, i32
  }
  func.func @transform_4(%arg0: i32, %arg1: i32) -> (i32, i32) {
    %c0_i32 = arith.constant 0 : i32
    %c0_i32_0 = arith.constant 0 : i32
    return %c0_i32, %arg1 : i32, i32
  }
  func.func @transform_5(%arg0: i32, %arg1: i32) -> (i32, i32) {
    %c0_i32 = arith.constant 0 : i32
    return %arg0, %arg1 : i32, i32
  }
}

</mosaic_0001>

<llo_original>
// kernel: vit_forward.12
$region0: #{vit_forward.12}
  #allocation0 [shape = 'u32[]', space=smem, size = 0x4, offset = 0x4, fixed_abs, tag = 'smem constant byte address 0x4 - core index']
  #allocation1 [shape = 'u32[144,128]{1,0:T(1,128)}', space=vmem, size = 0x12000, scoped, tag = 'internal scratch']
  #allocation2 [shape = 'f32[32,32]{1,0:T(8,128)}', space=vmem, size = 0x4000, scoped, tag = 'scratch operand']
  %s0 = inlined_call_operand.vmem [shape: f32[32,64], index: 0, kind: input, shape index: {}]
  %s1 = inlined_call_operand.vmem [shape: bf16[64,32], index: 1, kind: input, shape index: {}]
  %s2 = inlined_call_operand.vmem [shape: f32[1,32], index: 2, kind: input, shape index: {}]
  %s3 = inlined_call_operand.vmem [shape: f32[32,32], index: 3, kind: output, shape index: {}]
  %s4 = sld [smem:[#allocation0]]
  $region30: #{vit_forward.12} parent=0
    _
  %s6 = ssub.s32 1, %s4
  %s7 = scalar_select 0, %s6, %s4
  // Predicated region
  $region2: #{vit_forward.12} parent=0 // pred_check
    _
  $region3: #{vit_forward.12} parent=0 // pred_check_branch
    %9 = sbr.rel (0) target = $region5
  $region4: #{vit_forward.12} parent=0 // pred_region
    _
  $region5: #{vit_forward.12} parent=0 // pred_fallthru
    _
  // Predicated region
  $region6: #{vit_forward.12} parent=0 // pred_check
    _
  $region7: #{vit_forward.12} parent=0 // pred_check_branch
    %11 = sbr.rel (0) target = $region9
  $region8: #{vit_forward.12} parent=0 // pred_region
    _
  $region9: #{vit_forward.12} parent=0 // pred_fallthru
    _
  // Predicated region
  $region10: #{vit_forward.12} parent=0 // pred_check
    _
  $region11: #{vit_forward.12} parent=0 // pred_check_branch
    %13 = sbr.rel (0) target = $region13
  $region12: #{vit_forward.12} parent=0 // pred_region
    _
  $region13: #{vit_forward.12} parent=0 // pred_fallthru
    _
  %p15 = scmp.eq.s32.totalorder 0, 0
  // Predicated region
  $region14: #{vit_forward.12} parent=0 // pred_check
    %p16 = pneg %p15
  $region15: #{vit_forward.12} parent=0 // pred_check_branch
    %18 = sbr.rel (%p16) target = $region17
  $region16: #{vit_forward.12} parent=0 // pred_region
    %vm19 = vcmask 261120
    %20 = vst.msk [vmem:[#allocation2] sm:$0xff] %vm19, 0.0
    %21 = vst.msk [vmem:[#allocation2 + $0x8] sm:$0xff] %vm19, 0.0
    %22 = vst.msk [vmem:[#allocation2 + $0x10] sm:$0xff] %vm19, 0.0
    %23 = vst.msk [vmem:[#allocation2 + $0x18] sm:$0xff] %vm19, 0.0
  $region17: #{vit_forward.12} parent=0 // pred_fallthru
    _
  %v24 = vld [vmem:[#allocation2] sm:$0xff]
  %v25 = vld [vmem:[#allocation2 + $0x8] sm:$0xff]
  %v26 = vld [vmem:[#allocation2 + $0x10] sm:$0xff]
  %v27 = vld [vmem:[#allocation2 + $0x18] sm:$0xff]
  %v28 = vld [vmem:[%s0] sm:$0xff]
  %v29 = vld [vmem:[%s0 + $0x8] sm:$0xff]
  %v30 = vld [vmem:[%s0 + $0x10] sm:$0xff]
  %v31 = vld [vmem:[%s0 + $0x18] sm:$0xff]
  %v32 = vpack.c.bf16 %v29, %v28
  %v33 = vpack.c.bf16 %v31, %v30
  %v34 = vld [vmem:[%s1] sm:$0xf]
  %v35 = vld [vmem:[%s1 + $0x4] sm:$0xf]
  %v36 = vld [vmem:[%s1 + $0x8] sm:$0xf]
  %v37 = vld [vmem:[%s1 + $0xc] sm:$0xf]
  %v38 = vld [vmem:[%s1 + $0x10] sm:$0xf]
  %v39 = vld [vmem:[%s1 + $0x14] sm:$0xf]
  %v40 = vld [vmem:[%s1 + $0x18] sm:$0xf]
  %v41 = vld [vmem:[%s1 + $0x1c] sm:$0xf]
  %v50 = vunpack.c.l.b16 %v34
  %v51 = vunpack.c.l.b16 %v35
  %v52 = vunpack.c.l.b16 %v36
  %v53 = vunpack.c.l.b16 %v37
  %v54 = vunpack.c.l.b16 %v38
  %v55 = vunpack.c.l.b16 %v39
  %v56 = vunpack.c.l.b16 %v40
  %v57 = vunpack.c.l.b16 %v41
  %v58 = vpack.c.b16 %v51, %v50
  %v59 = vpack.c.b16 %v53, %v52
  %v60 = vpack.c.b16 %v55, %v54
  %v61 = vpack.c.b16 %v57, %v56
  %vm66 = vcmask 523264
  %v68 = vsel %vm66, %v32, 0
  %v71 = vsel %vm66, %v33, 0
  %73 = vmatprep.subr.bf16.mxu0 0
  %74 = vmatpush1.bf16.msra.mxu0 %v58
  %75 = vmatprep.subr.bf16.mxu0 0
  %76 = vmatpush1.bf16.msra.mxu0 %v59
  %77 = vmatprep.subr.bf16.mxu0 0
  %78 = vmatpush1.bf16.msra.mxu0 %v60
  %79 = vmatprep.subr.bf16.mxu0 0
  %80 = vmatpush1.bf16.msra.mxu0 %v61
  %81 = vmatprep.subr.bf16.mxu0 0
  %82 = vmatpush1.bf16.msra.mxu0 0
  %83 = vmatprep.subr.bf16.mxu0 0
  %84 = vmatpush1.bf16.msra.mxu0 0
  %85 = vmatprep.subr.bf16.mxu0 0
  %86 = vmatpush1.bf16.msra.mxu0 0
  %87 = vmatprep.subr.bf16.mxu0 0
  %88 = vmatpush1.bf16.msra.mxu0 0
  %89 = vmatprep.subr.bf16.mxu0 0
  %90 = vmatpush1.bf16.msra.mxu0 0
  %91 = vmatprep.subr.bf16.mxu0 0
  %92 = vmatpush1.bf16.msra.mxu0 0
  %93 = vmatprep.subr.bf16.mxu0 0
  %94 = vmatpush1.bf16.msra.mxu0 0
  %95 = vmatprep.subr.bf16.mxu0 0
  %96 = vmatpush1.bf16.msra.mxu0 0
  %97 = vmatprep.subr.bf16.mxu0 0
  %98 = vmatpush1.bf16.msra.mxu0 0
  %99 = vmatprep.subr.bf16.mxu0 0
  %100 = vmatpush1.bf16.msra.mxu0 0
  %101 = vmatprep.subr.bf16.mxu0 0
  %102 = vmatpush1.bf16.msra.mxu0 0
  %103 = vmatprep.subr.bf16.mxu0 0
  %104 = vmatpush1.bf16.msra.mxu0 0
  %105 = vmatprep.mubr.bf16.mxu0 0
  %106 = vmatmul.mubr.bf16.gmra.mrb[0].mxu0 %v68
  %v107 = vpop.f32.mrb[0].mxu0
  %v108 = vadd.f32 0.0, %v107
  %v109 = vpop.f32.mrb[0].mxu0
  %v110 = vpop.f32.mrb[0].mxu0
  %v111 = vadd.f32 0.0, %v110
  %v112 = vpop.f32.mrb[0].mxu0
  %113 = vmatprep.mubr.bf16.mxu0 0
  %114 = vmatmul.mubr.bf16.gmra.mrb[0].mxu0 %v71
  %v115 = vpop.f32.mrb[0].mxu0
  %v116 = vadd.f32 0.0, %v115
  %v117 = vpop.f32.mrb[0].mxu0
  %v118 = vpop.f32.mrb[0].mxu0
  %v119 = vadd.f32 0.0, %v118
  %v120 = vpop.f32.mrb[0].mxu0
  %121 = vdwg.mxu0
  %v122 = vadd.f32 %v24, %v108
  %v123 = vadd.f32 %v25, %v111
  %v124 = vadd.f32 %v26, %v116
  %v125 = vadd.f32 %v27, %v119
  %vm126 = vcmask 261120
  %127 = vst.msk [vmem:[#allocation2] sm:$0xff] %vm126, %v122
  %128 = vst.msk [vmem:[#allocation2 + $0x8] sm:$0xff] %vm126, %v123
  %129 = vst.msk [vmem:[#allocation2 + $0x10] sm:$0xff] %vm126, %v124
  %130 = vst.msk [vmem:[#allocation2 + $0x18] sm:$0xff] %vm126, %v125
  // Predicated region
  $region18: #{vit_forward.12} parent=0 // pred_check
    %p131 = pneg %p15
  $region19: #{vit_forward.12} parent=0 // pred_check_branch
    %133 = sbr.rel (%p131) target = $region21
  $region20: #{vit_forward.12} parent=0 // pred_region
    %v134 = vld [vmem:[#allocation2] sm:$0xff]
    %v135 = vld [vmem:[#allocation2 + $0x8] sm:$0xff]
    %v136 = vld [vmem:[#allocation2 + $0x10] sm:$0xff]
    %v137 = vld [vmem:[#allocation2 + $0x18] sm:$0xff]
    %v138 = vld [vmem:[%s2] sm:$0x1]
    %v140 = vlaneseq
    %v141 = vshrl.u32 %v140, 7
    %v142 = vsub.s32 0, %v141
    %v143 = vrot.slane %v138, %v142
    %v145 = vadd.f32 %v134, %v143
    %v146 = vadd.f32 %v135, %v143
    %v147 = vadd.f32 %v136, %v143
    %v148 = vadd.f32 %v137, %v143
    %149 = vst.msk [vmem:[%s3] sm:$0xff] %vm126, %v145
    %150 = vst.msk [vmem:[%s3 + $0x8] sm:$0xff] %vm126, %v146
    %151 = vst.msk [vmem:[%s3 + $0x10] sm:$0xff] %vm126, %v147
    %152 = vst.msk [vmem:[%s3 + $0x18] sm:$0xff] %vm126, %v148
  $region21: #{vit_forward.12} parent=0 // pred_fallthru
    _
  // Predicated region
  $region22: #{vit_forward.12} parent=0 // pred_check
    _
  $region23: #{vit_forward.12} parent=0 // pred_check_branch
    %154 = sbr.rel (0) target = $region25
  $region24: #{vit_forward.12} parent=0 // pred_region
    _
  $region25: #{vit_forward.12} parent=0 // pred_fallthru
    _
  // Predicated region
  $region26: #{vit_forward.12} parent=0 // pred_check
    _
  $region27: #{vit_forward.12} parent=0 // pred_check_branch
    %156 = sbr.rel (0) target = $region29
  $region28: #{vit_forward.12} parent=0 // pred_region
    _
  $region29: #{vit_forward.12} parent=0 // pred_fallthru
    _

// kernel: vit_forward.13
$region0: #{vit_forward.13}
  #allocation0 [shape = 'u32[]', space=smem, size = 0x4, offset = 0x4, fixed_abs, tag = 'smem constant byte address 0x4 - core index']
  #allocation1 [shape = 'u32[144,128]{1,0:T(1,128)}', space=vmem, size = 0x12000, scoped, tag = 'internal scratch']
  %s0 = inlined_call_operand.vmem [shape: f32[34,32], index: 0, kind: input, shape index: {}]
  %s1 = inlined_call_operand.vmem [shape: f32[1,32], index: 1, kind: input, shape index: {}]
  %s2 = inlined_call_operand.vmem [shape: f32[1,32], index: 2, kind: input, shape index: {}]
  %s3 = inlined_call_operand.vmem [shape: bf16[32,96], index: 3, kind: input, shape index: {}]
  %s4 = inlined_call_operand.vmem [shape: f32[1,96], index: 4, kind: input, shape index: {}]
  %s5 = inlined_call_operand.vmem [shape: bf16[34,96], index: 5, kind: output, shape index: {}]
  %s6 = sld [smem:[#allocation0]]
  $region30: #{vit_forward.13} parent=0
    _
  %s8 = ssub.s32 1, %s6
  %s9 = scalar_select 0, %s8, %s6
  // Predicated region
  $region2: #{vit_forward.13} parent=0 // pred_check
    _
  $region3: #{vit_forward.13} parent=0 // pred_check_branch
    %11 = sbr.rel (0) target = $region5
  $region4: #{vit_forward.13} parent=0 // pred_region
    _
  $region5: #{vit_forward.13} parent=0 // pred_fallthru
    _
  // Predicated region
  $region6: #{vit_forward.13} parent=0 // pred_check
    _
  $region7: #{vit_forward.13} parent=0 // pred_check_branch
    %13 = sbr.rel (0) target = $region9
  $region8: #{vit_forward.13} parent=0 // pred_region
    _
  $region9: #{vit_forward.13} parent=0 // pred_fallthru
    _
  // Predicated region
  $region10: #{vit_forward.13} parent=0 // pred_check
    _
  $region11: #{vit_forward.13} parent=0 // pred_check_branch
    %15 = sbr.rel (0) target = $region13
  $region12: #{vit_forward.13} parent=0 // pred_region
    _
  $region13: #{vit_forward.13} parent=0 // pred_fallthru
    _
  // Predicated region
  $region14: #{vit_forward.13} parent=0 // pred_check
    _
  $region15: #{vit_forward.13} parent=0 // pred_check_branch
    %17 = sbr.rel (0) target = $region17
  $region16: #{vit_forward.13} parent=0 // pred_region
    _
  $region17: #{vit_forward.13} parent=0 // pred_fallthru
    _
  // Predicated region
  $region18: #{vit_forward.13} parent=0 // pred_check
    _
  $region19: #{vit_forward.13} parent=0 // pred_check_branch
    %19 = sbr.rel (0) target = $region21
  $region20: #{vit_forward.13} parent=0 // pred_region
    _
  $region21: #{vit_forward.13} parent=0 // pred_fallthru
    _
  %v21 = vld [vmem:[%s0] sm:$0xff]
  %v22 = vld [vmem:[%s0 + $0x8] sm:$0xff]
  %v23 = vld [vmem:[%s0 + $0x10] sm:$0xff]
  %v24 = vld [vmem:[%s0 + $0x18] sm:$0xff]
  %v25 = vld [vmem:[%s0 + $0x20] sm:$0x3]
  %vm26 = vcmask 261120
  %v27 = vsel %vm26, %v21, 0.0
  %28 = vadd.xlane.f32.xlu0 %v27
  %v29 = vpop.xlane.xlu0 %28
  %v30 = vsel %vm26, %v22, 0.0
  %31 = vadd.xlane.f32.xlu0 %v30
  %v32 = vpop.xlane.xlu0 %31
  %v33 = vsel %vm26, %v23, 0.0
  %34 = vadd.xlane.f32.xlu0 %v33
  %v35 = vpop.xlane.xlu0 %34
  %v36 = vsel %vm26, %v24, 0.0
  %37 = vadd.xlane.f32.xlu0 %v36
  %v38 = vpop.xlane.xlu0 %37
  %vm39 = vcmask 254976
  %v40 = vsel %vm39, %v25, 0.0
  %41 = vadd.xlane.f32.xlu0 %v40
  %v42 = vpop.xlane.xlu0 %41
  %v43 = vrcp.pop 32.0
  %v44 = vmul.f32 %v29, %v43
  %v45 = vmul.f32 %v32, %v43
  %v46 = vmul.f32 %v35, %v43
  %v47 = vmul.f32 %v38, %v43
  %v48 = vmul.f32 %v42, %v43
  %v49 = vsub.f32 %v21, %v44
  %v50 = vsub.f32 %v22, %v45
  %v51 = vsub.f32 %v23, %v46
  %v52 = vsub.f32 %v24, %v47
  %v53 = vsub.f32 %v25, %v48
  %v54 = vmul.f32 %v49, %v49
  %v55 = vmul.f32 %v50, %v50
  %v56 = vmul.f32 %v51, %v51
  %v57 = vmul.f32 %v52, %v52
  %v58 = vmul.f32 %v53, %v53
  %v59 = vsel %vm26, %v54, 0.0
  %60 = vadd.xlane.f32.xlu0 %v59
  %v61 = vpop.xlane.xlu0 %60
  %v62 = vsel %vm26, %v55, 0.0
  %63 = vadd.xlane.f32.xlu0 %v62
  %v64 = vpop.xlane.xlu0 %63
  %v65 = vsel %vm26, %v56, 0.0
  %66 = vadd.xlane.f32.xlu0 %v65
  %v67 = vpop.xlane.xlu0 %66
  %v68 = vsel %vm26, %v57, 0.0
  %69 = vadd.xlane.f32.xlu0 %v68
  %v70 = vpop.xlane.xlu0 %69
  %v71 = vsel %vm39, %v58, 0.0
  %72 = vadd.xlane.f32.xlu0 %v71
  %v73 = vpop.xlane.xlu0 %72
  %v74 = vmul.f32 %v61, %v43
  %v75 = vmul.f32 %v64, %v43
  %v76 = vmul.f32 %v67, %v43
  %v77 = vmul.f32 %v70, %v43
  %v78 = vmul.f32 %v73, %v43
  %v79 = vadd.f32 %v74, 1e-06
  %v80 = vadd.f32 %v75, 1e-06
  %v81 = vadd.f32 %v76, 1e-06
  %v82 = vadd.f32 %v77, 1e-06
  %v83 = vadd.f32 %v78, 1e-06
  %v84 = vrsqrt.pop %v79
  %v85 = vrsqrt.pop %v80
  %v86 = vrsqrt.pop %v81
  %v87 = vrsqrt.pop %v82
  %v88 = vrsqrt.pop %v83
  %v89 = vmul.f32 %v49, %v84
  %v90 = vmul.f32 %v50, %v85
  %v91 = vmul.f32 %v51, %v86
  %v92 = vmul.f32 %v52, %v87
  %v93 = vmul.f32 %v53, %v88
  %v94 = vld [vmem:[%s1] sm:$0x1]
  %v96 = vlaneseq
  %v97 = vshrl.u32 %v96, 7
  %v98 = vsub.s32 0, %v97
  %v99 = vrot.slane %v94, %v98
  %v101 = vmul.f32 %v89, %v99
  %v102 = vmul.f32 %v90, %v99
  %v103 = vmul.f32 %v91, %v99
  %v104 = vmul.f32 %v92, %v99
  %v105 = vmul.f32 %v93, %v99
  %v106 = vld [vmem:[%s2] sm:$0x1]
  %v108 = vlaneseq
  %v109 = vshrl.u32 %v108, 7
  %v110 = vsub.s32 0, %v109
  %v111 = vrot.slane %v106, %v110
  %v113 = vadd.f32 %v101, %v111
  %v114 = vadd.f32 %v102, %v111
  %v115 = vadd.f32 %v103, %v111
  %v116 = vadd.f32 %v104, %v111
  %v117 = vadd.f32 %v105, %v111
  %v118 = vpack.c.bf16 %v114, %v113
  %v119 = vpack.c.bf16 %v116, %v115
  %v120 = vpack.c.bf16 %v117, %v117
  %v121 = vld [vmem:[%s3] sm:$0xf]
  %v122 = vld [vmem:[%s3 + $0x4] sm:$0xf]
  %v123 = vld [vmem:[%s3 + $0x8] sm:$0xf]
  %v124 = vld [vmem:[%s3 + $0xc] sm:$0xf]
  %v125 = vld [vmem:[%s4] sm:$0x1]
  %v127 = vlaneseq
  %v128 = vshrl.u32 %v127, 7
  %v129 = vsub.s32 0, %v128
  %v130 = vrot.slane %v125, %v129
  %v136 = vunpack.c.l.b16 %v121
  %v137 = vunpack.c.l.b16 %v122
  %v138 = vunpack.c.l.b16 %v123
  %v139 = vunpack.c.l.b16 %v124
  %v140 = vpack.c.b16 %v137, %v136
  %v141 = vpack.c.b16 %v139, %v138
  %v145 = vsel %vm26, %v118, 0
  %v148 = vsel %vm26, %v119, 0
  %v151 = vsel %vm26, %v120, 0
  %153 = vmatprep.subr.bf16.mxu0 0
  %154 = vmatpush1.bf16.msra.mxu0 %v140
  %155 = vmatprep.subr.bf16.mxu0 0
  %156 = vmatpush1.bf16.msra.mxu0 %v141
  %157 = vmatprep.subr.bf16.mxu0 0
  %158 = vmatpush1.bf16.msra.mxu0 0
  %159 = vmatprep.subr.bf16.mxu0 0
  %160 = vmatpush1.bf16.msra.mxu0 0
  %161 = vmatprep.subr.bf16.mxu0 0
  %162 = vmatpush1.bf16.msra.mxu0 0
  %163 = vmatprep.subr.bf16.mxu0 0
  %164 = vmatpush1.bf16.msra.mxu0 0
  %165 = vmatprep.subr.bf16.mxu0 0
  %166 = vmatpush1.bf16.msra.mxu0 0
  %167 = vmatprep.subr.bf16.mxu0 0
  %168 = vmatpush1.bf16.msra.mxu0 0
  %169 = vmatprep.subr.bf16.mxu0 0
  %170 = vmatpush1.bf16.msra.mxu0 0
  %171 = vmatprep.subr.bf16.mxu0 0
  %172 = vmatpush1.bf16.msra.mxu0 0
  %173 = vmatprep.subr.bf16.mxu0 0
  %174 = vmatpush1.bf16.msra.mxu0 0
  %175 = vmatprep.subr.bf16.mxu0 0
  %176 = vmatpush1.bf16.msra.mxu0 0
  %177 = vmatprep.subr.bf16.mxu0 0
  %178 = vmatpush1.bf16.msra.mxu0 0
  %179 = vmatprep.subr.bf16.mxu0 0
  %180 = vmatpush1.bf16.msra.mxu0 0
  %181 = vmatprep.subr.bf16.mxu0 0
  %182 = vmatpush1.bf16.msra.mxu0 0
  %183 = vmatprep.subr.bf16.mxu0 0
  %184 = vmatpush1.bf16.msra.mxu0 0
  %185 = vmatprep.mubr.bf16.mxu0 0
  %186 = vmatmul.mubr.bf16.gmra.mrb[0].mxu0 %v145
  %v187 = vpop.f32.mrb[0].mxu0
  %v188 = vadd.f32 %v130, %v187
  %v189 = vpop.f32.mrb[0].mxu0
  %v190 = vpop.f32.mrb[0].mxu0
  %v191 = vadd.f32 %v130, %v190
  %v192 = vpop.f32.mrb[0].mxu0
  %193 = vmatprep.mubr.bf16.mxu0 0
  %194 = vmatmul.mubr.bf16.gmra.mrb[0].mxu0 %v148
  %v195 = vpop.f32.mrb[0].mxu0
  %v196 = vadd.f32 %v130, %v195
  %v197 = vpop.f32.mrb[0].mxu0
  %v198 = vpop.f32.mrb[0].mxu0
  %v199 = vadd.f32 %v130, %v198
  %v200 = vpop.f32.mrb[0].mxu0
  %201 = vmatprep.mubr.bf16.mxu0 0
  %202 = vmatmul.mubr.bf16.gmra.mrb[0].mxu0 %v151
  %v203 = vpop.f32.mrb[0].mxu0
  %v204 = vadd.f32 %v130, %v203
  %v205 = vpop.f32.mrb[0].mxu0
  %v206 = vpop.f32.mrb[0].mxu0
  %v207 = vpop.f32.mrb[0].mxu0
  %208 = vdwg.mxu0
  %v209 = vpack.c.bf16 %v191, %v188
  %v210 = vpack.c.bf16 %v199, %v196
  %v211 = vpack.c.bf16 %v204, %v204
  %v215 = vunpack.c.l.b16 %v209
  %v216 = vunpack.c.h.b16 %v209
  %v217 = vunpack.c.l.b16 %v210
  %v218 = vunpack.c.h.b16 %v210
  %v219 = vunpack.c.l.b16 %v211
  %v220 = vpack.c.b16 %v215, %v215
  %v221 = vpack.c.b16 %v216, %v216
  %v222 = vpack.c.b16 %v217, %v217
  %v223 = vpack.c.b16 %v218, %v218
  %v224 = vpack.c.b16 %v219, %v219
  %vm230 = vcmask 781312
  %231 = vst.msk [vmem:[%s5] sm:$0xf] %vm230, %v220
  %232 = vst.msk [vmem:[%s5 + $0x4] sm:$0xf] %vm230, %v221
  %233 = vst.msk [vmem:[%s5 + $0x8] sm:$0xf] %vm230, %v222
  %234 = vst.msk [vmem:[%s5 + $0xc] sm:$0xf] %vm230, %v223
  %vm235 = vcmask 778240
  %236 = vst.msk [vmem:[%s5 + $0x10] sm:$0x1] %vm235, %v224
  // Predicated region
  $region22: #{vit_forward.13} parent=0 // pred_check
    _
  $region23: #{vit_forward.13} parent=0 // pred_check_branch
    %238 = sbr.rel (0) target = $region25
  $region24: #{vit_forward.13} parent=0 // pred_region
    _
  $region25: #{vit_forward.13} parent=0 // pred_fallthru
    _
  // Predicated region
  $region26: #{vit_forward.13} parent=0 // pred_check
    _
  $region27: #{vit_forward.13} parent=0 // pred_check_branch
    %240 = sbr.rel (0) target = $region29
  $region28: #{vit_forward.13} parent=0 // pred_region
    _
  $region29: #{vit_forward.13} parent=0 // pred_fallthru
    _

// kernel: vit_forward.14
$region0: #{vit_forward.14}
  #allocation0 [shape = 'u32[]', space=smem, size = 0x4, offset = 0x4, fixed_abs, tag = 'smem constant byte address 0x4 - core index']
  #allocation1 [shape = 'u32[144,128]{1,0:T(1,128)}', space=vmem, size = 0x12000, scoped, tag = 'internal scratch']
  %s0 = inlined_call_operand.vmem [shape: bf16[2,17,96], index: 0, kind: input, shape index: {}]
  %s1 = inlined_call_operand.vmem [shape: bf16[2,17,32], index: 1, kind: output, shape index: {}]
  %s2 = sld [smem:[#allocation0]]
  $region37: #{vit_forward.14} parent=0
    _
  %s4 = ssub.s32 1, %s2
  %s5 = scalar_select 0, %s4, %s2
  loop: start=0, step=1, limit=4
  $region2: #{vit_forward.14} parent=0 // loop_pre_header
    _
  $region3: #{vit_forward.14} parent=0 // loop_header
    %s7 = sphi 0, %s11
    %p8 = scmp.ge.s32.totalorder %s7, 4
    %s17 = sphi 0, %s19
    %s20 = sphi 0, %s17
    %s21 = sphi 0, %s20
    %s37 = sphi 0, %s21
    %s43 = sphi 0, %s45
    %s46 = sphi 0, %s43
    %s47 = sphi 0, %s46
    %s63 = sphi 0, %s47
  $region4: #{vit_forward.14} parent=0 // loop_header_branch
    %10 = sbr.rel (%p8) target = $region8
  $region5: #{vit_forward.14} parent=0 // loop_body
    %s12 = ssub.s32 %s7, 1
    %s13 = ssub.s32 %s7, 2
    %s14 = sadd.s32 %s7, 1
    %s15 = ssub.s32 %s7, %s14
    %p16 = scmp.eq.s32.totalorder %s15, 0
    %s18 = sadd.s32 %s17, 1
    %s19 = scalar_select %p16, %s17, %s18
    %p22 = pneg %p16
    %p23 = scmp.eq.s32.totalorder %s7, 1
    %p24 = por %p22, %p23
    %p25 = scmp.ne.s32.totalorder %s17, %s20
    %p26 = scmp.eq.s32.totalorder %s7, 0
    %p27 = por %p25, %p26
    %p28 = scmp.ne.s32.totalorder %s17, %s20
    %p29 = scmp.eq.s32.totalorder %s12, 1
    %p30 = por %p28, %p29
    %p31 = scmp.ne.s32.totalorder %s20, %s21
    %p32 = scmp.eq.s32.totalorder %s12, 0
    %p33 = por %p31, %p32
    %p34 = scmp.ne.s32.totalorder %s20, %s21
    %p35 = scmp.eq.s32.totalorder %s13, 1
    %p36 = por %p34, %p35
    %p38 = scmp.ne.s32.totalorder %s21, %s37
    %p39 = scmp.eq.s32.totalorder %s13, 0
    %p40 = por %p38, %p39
    %s41 = ssub.s32 %s7, %s14
    %p42 = scmp.eq.s32.totalorder %s41, 0
    %s44 = sadd.s32 %s43, 1
    %s45 = scalar_select %p42, %s43, %s44
    %p48 = pneg %p42
    %p49 = scmp.eq.s32.totalorder %s7, 1
    %p50 = por %p48, %p49
    %p51 = scmp.ne.s32.totalorder %s43, %s46
    %p52 = scmp.eq.s32.totalorder %s7, 0
    %p53 = por %p51, %p52
    %p54 = scmp.ne.s32.totalorder %s43, %s46
    %p55 = scmp.eq.s32.totalorder %s12, 1
    %p56 = por %p54, %p55
    %p57 = scmp.ne.s32.totalorder %s46, %s47
    %p58 = scmp.eq.s32.totalorder %s12, 0
    %p59 = por %p57, %p58
    %p60 = scmp.ne.s32.totalorder %s46, %s47
    %p61 = scmp.eq.s32.totalorder %s13, 1
    %p62 = por %p60, %p61
    %p64 = scmp.ne.s32.totalorder %s47, %s63
    %p65 = scmp.eq.s32.totalorder %s13, 0
    %p66 = por %p64, %p65
    %p67 = scmp.le.s32.totalorder 1, %s7
    %p68 = scmp.lt.s32.totalorder %s7, 3
    %p69 = pnand %p67, %p68
    %p70 = pneg %p69
    // Predicated region
    $region9: #{vit_forward.14} parent=5 // pred_check
      _
    $region10: #{vit_forward.14} parent=5 // pred_check_branch
      %72 = sbr.rel (%p69) target = $region12
    $region11: #{vit_forward.14} parent=5 // pred_region
      %s73 = ssub.s32 %s7, 1
    $region12: #{vit_forward.14} parent=5 // pred_fallthru
      _
    %p74 = scmp.lt.s32.totalorder %s7, 2
    // Predicated region
    $region13: #{vit_forward.14} parent=5 // pred_check
      %p75 = pneg %p74
    $region14: #{vit_forward.14} parent=5 // pred_check_branch
      %77 = sbr.rel (%p75) target = $region16
    $region15: #{vit_forward.14} parent=5 // pred_region
      // Predicated region
      $region17: #{vit_forward.14} parent=15 // pred_check
        %p78 = pneg %p27
      $region18: #{vit_forward.14} parent=15 // pred_check_branch
        %80 = sbr.rel (%p78) target = $region20
      $region19: #{vit_forward.14} parent=15 // pred_region
        %p81 = scmp.lt.s32.totalorder %s7, 1
        %s82 = scalar_select %p81, %s7, 1
        %s83 = smul.addr %s82, 3
        %s84 = smul.addr %s83, 4
        %s85 = scalar_lea.vmem %s0, %s84
      $region20: #{vit_forward.14} parent=15 // pred_fallthru
        _
    $region16: #{vit_forward.14} parent=5 // pred_fallthru
      _
    %p86 = scmp.le.s32.totalorder 1, %s7
    %p87 = scmp.lt.s32.totalorder %s7, 3
    %p88 = pnand %p86, %p87
    %p89 = pneg %p88
    // Predicated region
    $region21: #{vit_forward.14} parent=5 // pred_check
      _
    $region22: #{vit_forward.14} parent=5 // pred_check_branch
      %91 = sbr.rel (%p88) target = $region24
    $region23: #{vit_forward.14} parent=5 // pred_region
      %s92 = ssub.s32 %s7, 1
      %p93 = scmp.lt.s32.totalorder %s12, 1
      %s94 = scalar_select %p93, %s12, 1
      %s95 = smul.addr %s94, 3
      %s96 = smul.addr %s95, 4
      %s97 = scalar_lea.vmem %s0, %s96
      %p98 = pneg %p33
      %p99 = pneg %p30
      %p100 = pneg %p59
      %p101 = pneg %p56
      %p102 = scmp.lt.s32.totalorder %s12, 1
      %s103 = scalar_select %p102, %s12, 1
      %s104 = smul.addr %s103, 3
      %s105 = smul.addr %s104, 4
      %s106 = scalar_lea.vmem %s1, %s105
      %p107 = scmp.lt.s32.totalorder %s12, 1
      %s108 = scalar_select %p107, %s12, 1
      %s109 = smul.addr %s108, 3
      %s110 = smul.addr %s109, 4
      %s111 = scalar_lea.vmem %s0, %s110
      %p112 = scmp.lt.s32.totalorder %s12, 1
      %s113 = scalar_select %p112, %s12, 1
      %s114 = smul.addr %s113, 3
      %s115 = smul.addr %s114, 4
      %s116 = scalar_lea.vmem %s1, %s115
      %v118 = vld [vmem:[%s111] sm:$0xf]
      %v119 = vld [vmem:[%s111 + $0x4] sm:$0xf]
      %v120 = vld [vmem:[%s111 + $0x8] sm:$0x1]
      %v121 = vunpack.c.l.bf16 %v118
      %v122 = vunpack.c.l.bf16 %v119
      %v123 = vunpack.c.l.bf16 %v120
      %v124 = vmul.f32 %v121, 0.35355338
      %v125 = vmul.f32 %v122, 0.35355338
      %v126 = vmul.f32 %v123, 0.35355338
      %v127 = vpack.c.bf16 %v125, %v124
      %v128 = vpack.c.bf16 %v126, %v126
      %v132 = vunpack.c.l.b16 %v118
      %v133 = vunpack.c.l.b16 %v119
      %v134 = vunpack.c.l.b16 %v120
      %v135 = vpack.c.b16 %v133, %v132
      %v136 = vpack.c.b16 %v134, %v134
      %137 = vrot.lane.b32.xlu0 %v135, 96
      %v138 = vpop.permute.xlu0 %137
      %139 = vrot.lane.b32.xlu0 %v136, 96
      %v140 = vpop.permute.xlu0 %139
      %vm141 = vcmask 64512
      %v143 = vsel %vm141, %v127, 0
      %v146 = vsel %vm141, %v128, 0
      %v149 = vsel %vm141, %v138, 0
      %v152 = vsel %vm141, %v140, 0
      %154 = vmatprep.subr.bf16.mxu0 0
      %155 = vmatpush1.bf16.xpose.msra.mxu0 %v149
      %156 = vmatprep.subr.bf16.mxu0 0
      %157 = vmatpush1.bf16.xpose.msra.mxu0 %v152
      %158 = vmatprep.subr.bf16.mxu0 0
      %159 = vmatpush1.bf16.xpose.msra.mxu0 0
      %160 = vmatprep.subr.bf16.mxu0 0
      %161 = vmatpush1.bf16.xpose.msra.mxu0 0
      %162 = vmatprep.subr.bf16.mxu0 0
      %163 = vmatpush1.bf16.xpose.msra.mxu0 0
      %164 = vmatprep.subr.bf16.mxu0 0
      %165 = vmatpush1.bf16.xpose.msra.mxu0 0
      %166 = vmatprep.subr.bf16.mxu0 0
      %167 = vmatpush1.bf16.xpose.msra.mxu0 0
      %168 = vmatprep.subr.bf16.mxu0 0
      %169 = vmatpush1.bf16.xpose.msra.mxu0 0
      %170 = vmatprep.subr.bf16.mxu0 0
      %171 = vmatpush1.bf16.xpose.msra.mxu0 0
      %172 = vmatprep.subr.bf16.mxu0 0
      %173 = vmatpush1.bf16.xpose.msra.mxu0 0
      %174 = vmatprep.subr.bf16.mxu0 0
      %175 = vmatpush1.bf16.xpose.msra.mxu0 0
      %176 = vmatprep.subr.bf16.mxu0 0
      %177 = vmatpush1.bf16.xpose.msra.mxu0 0
      %178 = vmatprep.subr.bf16.mxu0 0
      %179 = vmatpush1.bf16.xpose.msra.mxu0 0
      %180 = vmatprep.subr.bf16.mxu0 0
      %181 = vmatpush1.bf16.xpose.msra.mxu0 0
      %182 = vmatprep.subr.bf16.mxu0 0
      %183 = vmatpush1.bf16.xpose.msra.mxu0 0
      %184 = vmatprep.subr.bf16.mxu0 0
      %185 = vmatpush1.bf16.xpose.msra.mxu0 0
      %186 = vmatprep.mubr.bf16.mxu0 0
      %187 = vmatmul.mubr.bf16.gmra.mrb[0].mxu0 %v143
      %v188 = vpop.f32.mrb[0].mxu0
      %v189 = vadd.f32 0.0, %v188
      %v190 = vpop.f32.mrb[0].mxu0
      %v191 = vpop.f32.mrb[0].mxu0
      %v192 = vadd.f32 0.0, %v191
      %v193 = vpop.f32.mrb[0].mxu0
      %194 = vmatprep.mubr.bf16.mxu0 0
      %195 = vmatmul.mubr.bf16.gmra.mrb[0].mxu0 %v146
      %v196 = vpop.f32.mrb[0].mxu0
      %v197 = vadd.f32 0.0, %v196
      %v198 = vpop.f32.mrb[0].mxu0
      %v199 = vpop.f32.mrb[0].mxu0
      %v200 = vpop.f32.mrb[0].mxu0
      %201 = vdwg.mxu0
      %vm202 = vcmask 138240
      %v203 = vsel %vm202, %v189, -inf
      %204 = vmax.xlane.f32.xlu0 %v203
      %v205 = vpop.xlane.xlu0 %204
      %v206 = vsel %vm202, %v192, -inf
      %207 = vmax.xlane.f32.xlu0 %v206
      %v208 = vpop.xlane.xlu0 %207
      %vm209 = vcmask 131072
      %v210 = vsel %vm209, %v197, -inf
      %211 = vmax.xlane.f32.xlu0 %v210
      %v212 = vpop.xlane.xlu0 %211
      %v213 = vsub.f32 %v189, %v205
      %v214 = vsub.f32 %v192, %v208
      %v215 = vsub.f32 %v197, %v212
      %v216 = vmul.f32 %v213, 1.442695
      %v217 = vpow.pop %v216
      %v218 = vmul.f32 %v214, 1.442695
      %v219 = vpow.pop %v218
      %v220 = vmul.f32 %v215, 1.442695
      %v221 = vpow.pop %v220
      %v222 = vsel %vm202, %v217, 0.0
      %223 = vadd.xlane.f32.xlu0 %v222
      %v224 = vpop.xlane.xlu0 %223
      %v225 = vsel %vm202, %v219, 0.0
      %226 = vadd.xlane.f32.xlu0 %v225
      %v227 = vpop.xlane.xlu0 %226
      %v228 = vsel %vm209, %v221, 0.0
      %229 = vadd.xlane.f32.xlu0 %v228
      %v230 = vpop.xlane.xlu0 %229
      %v231 = vrcp.pop %v224
      %v232 = vrcp.pop %v227
      %v233 = vrcp.pop %v230
      %v234 = vmul.f32 %v217, %v231
      %v235 = vmul.f32 %v219, %v232
      %v236 = vmul.f32 %v221, %v233
      %v237 = vpack.c.bf16 %v235, %v234
      %v238 = vpack.c.bf16 %v236, %v236
      %239 = vrot.lane.b32.xlu0 %v135, 64
      %v240 = vpop.permute.xlu0 %239
      %241 = vrot.lane.b32.xlu0 %v136, 64
      %v242 = vpop.permute.xlu0 %241
      %v245 = vsel %vm202, %v237, 0
      %v248 = vsel %vm202, %v238, 0
      %vm250 = vcmask 1040384
      %v251 = vsel 0, 4294967295, 65535
      %v252 = vsel %vm250, %v251, 0
      %v254 = vand.u32 %v242, %v252
      %256 = vmatprep.subr.bf16.mxu0 0
      %257 = vmatpush1.bf16.msra.mxu0 %v240
      %258 = vmatprep.subr.bf16.mxu0 0
      %259 = vmatpush1.bf16.msra.mxu0 %v254
      %260 = vmatprep.subr.bf16.mxu0 0
      %261 = vmatpush1.bf16.msra.mxu0 0
      %262 = vmatprep.subr.bf16.mxu0 0
      %263 = vmatpush1.bf16.msra.mxu0 0
      %264 = vmatprep.subr.bf16.mxu0 0
      %265 = vmatpush1.bf16.msra.mxu0 0
      %266 = vmatprep.subr.bf16.mxu0 0
      %267 = vmatpush1.bf16.msra.mxu0 0
      %268 = vmatprep.subr.bf16.mxu0 0
      %269 = vmatpush1.bf16.msra.mxu0 0
      %270 = vmatprep.subr.bf16.mxu0 0
      %271 = vmatpush1.bf16.msra.mxu0 0
      %272 = vmatprep.subr.bf16.mxu0 0
      %273 = vmatpush1.bf16.msra.mxu0 0
      %274 = vmatprep.subr.bf16.mxu0 0
      %275 = vmatpush1.bf16.msra.mxu0 0
      %276 = vmatprep.subr.bf16.mxu0 0
      %277 = vmatpush1.bf16.msra.mxu0 0
      %278 = vmatprep.subr.bf16.mxu0 0
      %279 = vmatpush1.bf16.msra.mxu0 0
      %280 = vmatprep.subr.bf16.mxu0 0
      %281 = vmatpush1.bf16.msra.mxu0 0
      %282 = vmatprep.subr.bf16.mxu0 0
      %283 = vmatpush1.bf16.msra.mxu0 0
      %284 = vmatprep.subr.bf16.mxu0 0
      %285 = vmatpush1.bf16.msra.mxu0 0
      %286 = vmatprep.subr.bf16.mxu0 0
      %287 = vmatpush1.bf16.msra.mxu0 0
      %288 = vmatprep.mubr.bf16.mxu0 0
      %289 = vmatmul.mubr.bf16.gmra.mrb[0].mxu0 %v245
      %v290 = vpop.f32.mrb[0].mxu0
      %v291 = vadd.f32 0.0, %v290
      %v292 = vpop.f32.mrb[0].mxu0
      %v293 = vpop.f32.mrb[0].mxu0
      %v294 = vadd.f32 0.0, %v293
      %v295 = vpop.f32.mrb[0].mxu0
      %296 = vmatprep.mubr.bf16.mxu0 0
      %297 = vmatmul.mubr.bf16.gmra.mrb[0].mxu0 %v248
      %v298 = vpop.f32.mrb[0].mxu0
      %v299 = vadd.f32 0.0, %v298
      %v300 = vpop.f32.mrb[0].mxu0
      %v301 = vpop.f32.mrb[0].mxu0
      %v302 = vpop.f32.mrb[0].mxu0
      %303 = vdwg.mxu0
      %306 = vrot.lane.b32.xlu0 %v127, 120
      %v307 = vpop.permute.xlu0 %306
      %308 = vrot.lane.b32.xlu0 %v128, 120
      %v309 = vpop.permute.xlu0 %308
      %310 = vrot.lane.b32.xlu0 %v135, 88
      %v311 = vpop.permute.xlu0 %310
      %312 = vrot.lane.b32.xlu0 %v136, 88
      %v313 = vpop.permute.xlu0 %312
      %v315 = vsel %vm141, %v307, 0
      %v318 = vsel %vm141, %v309, 0
      %v321 = vsel %vm141, %v311, 0
      %v324 = vsel %vm141, %v313, 0
      %326 = vmatprep.subr.bf16.mxu0 0
      %327 = vmatpush1.bf16.xpose.msra.mxu0 %v321
      %328 = vmatprep.subr.bf16.mxu0 0
      %329 = vmatpush1.bf16.xpose.msra.mxu0 %v324
      %330 = vmatprep.subr.bf16.mxu0 0
      %331 = vmatpush1.bf16.xpose.msra.mxu0 0
      %332 = vmatprep.subr.bf16.mxu0 0
      %333 = vmatpush1.bf16.xpose.msra.mxu0 0
      %334 = vmatprep.subr.bf16.mxu0 0
      %335 = vmatpush1.bf16.xpose.msra.mxu0 0
      %336 = vmatprep.subr.bf16.mxu0 0
      %337 = vmatpush1.bf16.xpose.msra.mxu0 0
      %338 = vmatprep.subr.bf16.mxu0 0
      %339 = vmatpush1.bf16.xpose.msra.mxu0 0
      %340 = vmatprep.subr.bf16.mxu0 0
      %341 = vmatpush1.bf16.xpose.msra.mxu0 0
      %342 = vmatprep.subr.bf16.mxu0 0
      %343 = vmatpush1.bf16.xpose.msra.mxu0 0
      %344 = vmatprep.subr.bf16.mxu0 0
      %345 = vmatpush1.bf16.xpose.msra.mxu0 0
      %346 = vmatprep.subr.bf16.mxu0 0
      %347 = vmatpush1.bf16.xpose.msra.mxu0 0
      %348 = vmatprep.subr.bf16.mxu0 0
      %349 = vmatpush1.bf16.xpose.msra.mxu0 0
      %350 = vmatprep.subr.bf16.mxu0 0
      %351 = vmatpush1.bf16.xpose.msra.mxu0 0
      %352 = vmatprep.subr.bf16.mxu0 0
      %353 = vmatpush1.bf16.xpose.msra.mxu0 0
      %354 = vmatprep.subr.bf16.mxu0 0
      %355 = vmatpush1.bf16.xpose.msra.mxu0 0
      %356 = vmatprep.subr.bf16.mxu0 0
      %357 = vmatpush1.bf16.xpose.msra.mxu0 0
      %358 = vmatprep.mubr.bf16.mxu0 0
      %359 = vmatmul.mubr.bf16.gmra.mrb[0].mxu0 %v315
      %v360 = vpop.f32.mrb[0].mxu0
      %v361 = vadd.f32 0.0, %v360
      %v362 = vpop.f32.mrb[0].mxu0
      %v363 = vpop.f32.mrb[0].mxu0
      %v364 = vadd.f32 0.0, %v363
      %v365 = vpop.f32.mrb[0].mxu0
      %366 = vmatprep.mubr.bf16.mxu0 0
      %367 = vmatmul.mubr.bf16.gmra.mrb[0].mxu0 %v318
      %v368 = vpop.f32.mrb[0].mxu0
      %v369 = vadd.f32 0.0, %v368
      %v370 = vpop.f32.mrb[0].mxu0
      %v371 = vpop.f32.mrb[0].mxu0
      %v372 = vpop.f32.mrb[0].mxu0
      %373 = vdwg.mxu0
      %v374 = vsel %vm202, %v361, -inf
      %375 = vmax.xlane.f32.xlu0 %v374
      %v376 = vpop.xlane.xlu0 %375
      %v377 = vsel %vm202, %v364, -inf
      %378 = vmax.xlane.f32.xlu0 %v377
      %v379 = vpop.xlane.xlu0 %378
      %v380 = vsel %vm209, %v369, -inf
      %381 = vmax.xlane.f32.xlu0 %v380
      %v382 = vpop.xlane.xlu0 %381
      %v383 = vsub.f32 %v361, %v376
      %v384 = vsub.f32 %v364, %v379
      %v385 = vsub.f32 %v369, %v382
      %v386 = vmul.f32 %v383, 1.442695
      %v387 = vpow.pop %v386
      %v388 = vmul.f32 %v384, 1.442695
      %v389 = vpow.pop %v388
      %v390 = vmul.f32 %v385, 1.442695
      %v391 = vpow.pop %v390
      %v392 = vsel %vm202, %v387, 0.0
      %393 = vadd.xlane.f32.xlu0 %v392
      %v394 = vpop.xlane.xlu0 %393
      %v395 = vsel %vm202, %v389, 0.0
      %396 = vadd.xlane.f32.xlu0 %v395
      %v397 = vpop.xlane.xlu0 %396
      %v398 = vsel %vm209, %v391, 0.0
      %399 = vadd.xlane.f32.xlu0 %v398
      %v400 = vpop.xlane.xlu0 %399
      %v401 = vrcp.pop %v394
      %v402 = vrcp.pop %v397
      %v403 = vrcp.pop %v400
      %v404 = vmul.f32 %v387, %v401
      %v405 = vmul.f32 %v389, %v402
      %v406 = vmul.f32 %v391, %v403
      %v407 = vpack.c.bf16 %v405, %v404
      %v408 = vpack.c.bf16 %v406, %v406
      %409 = vrot.lane.b32.xlu0 %v135, 56
      %v410 = vpop.permute.xlu0 %409
      %411 = vrot.lane.b32.xlu0 %v136, 56
      %v412 = vpop.permute.xlu0 %411
      %v415 = vsel %vm202, %v407, 0
      %v418 = vsel %vm202, %v408, 0
      %v421 = vand.u32 %v412, %v252
      %423 = vmatprep.subr.bf16.mxu0 0
      %424 = vmatpush1.bf16.msra.mxu0 %v410
      %425 = vmatprep.subr.bf16.mxu0 0
      %426 = vmatpush1.bf16.msra.mxu0 %v421
      %427 = vmatprep.subr.bf16.mxu0 0
      %428 = vmatpush1.bf16.msra.mxu0 0
      %429 = vmatprep.subr.bf16.mxu0 0
      %430 = vmatpush1.bf16.msra.mxu0 0
      %431 = vmatprep.subr.bf16.mxu0 0
      %432 = vmatpush1.bf16.msra.mxu0 0
      %433 = vmatprep.subr.bf16.mxu0 0
      %434 = vmatpush1.bf16.msra.mxu0 0
      %435 = vmatprep.subr.bf16.mxu0 0
      %436 = vmatpush1.bf16.msra.mxu0 0
      %437 = vmatprep.subr.bf16.mxu0 0
      %438 = vmatpush1.bf16.msra.mxu0 0
      %439 = vmatprep.subr.bf16.mxu0 0
      %440 = vmatpush1.bf16.msra.mxu0 0
      %441 = vmatprep.subr.bf16.mxu0 0
      %442 = vmatpush1.bf16.msra.mxu0 0
      %443 = vmatprep.subr.bf16.mxu0 0
      %444 = vmatpush1.bf16.msra.mxu0 0
      %445 = vmatprep.subr.bf16.mxu0 0
      %446 = vmatpush1.bf16.msra.mxu0 0
      %447 = vmatprep.subr.bf16.mxu0 0
      %448 = vmatpush1.bf16.msra.mxu0 0
      %449 = vmatprep.subr.bf16.mxu0 0
      %450 = vmatpush1.bf16.msra.mxu0 0
      %451 = vmatprep.subr.bf16.mxu0 0
      %452 = vmatpush1.bf16.msra.mxu0 0
      %453 = vmatprep.subr.bf16.mxu0 0
      %454 = vmatpush1.bf16.msra.mxu0 0
      %455 = vmatprep.mubr.bf16.mxu0 0
      %456 = vmatmul.mubr.bf16.gmra.mrb[0].mxu0 %v415
      %v457 = vpop.f32.mrb[0].mxu0
      %v458 = vadd.f32 0.0, %v457
      %v459 = vpop.f32.mrb[0].mxu0
      %v460 = vpop.f32.mrb[0].mxu0
      %v461 = vadd.f32 0.0, %v460
      %v462 = vpop.f32.mrb[0].mxu0
      %463 = vmatprep.mubr.bf16.mxu0 0
      %464 = vmatmul.mubr.bf16.gmra.mrb[0].mxu0 %v418
      %v465 = vpop.f32.mrb[0].mxu0
      %v466 = vadd.f32 0.0, %v465
      %v467 = vpop.f32.mrb[0].mxu0
      %v468 = vpop.f32.mrb[0].mxu0
      %v469 = vpop.f32.mrb[0].mxu0
      %470 = vdwg.mxu0
      %471 = vrot.lane.b32.xlu0 %v127, 112
      %v472 = vpop.permute.xlu0 %471
      %473 = vrot.lane.b32.xlu0 %v128, 112
      %v474 = vpop.permute.xlu0 %473
      %475 = vrot.lane.b32.xlu0 %v135, 80
      %v476 = vpop.permute.xlu0 %475
      %477 = vrot.lane.b32.xlu0 %v136, 80
      %v478 = vpop.permute.xlu0 %477
      %v480 = vsel %vm141, %v472, 0
      %v483 = vsel %vm141, %v474, 0
      %v486 = vsel %vm141, %v476, 0
      %v489 = vsel %vm141, %v478, 0
      %491 = vmatprep.subr.bf16.mxu0 0
      %492 = vmatpush1.bf16.xpose.msra.mxu0 %v486
      %493 = vmatprep.subr.bf16.mxu0 0
      %494 = vmatpush1.bf16.xpose.msra.mxu0 %v489
      %495 = vmatprep.subr.bf16.mxu0 0
      %496 = vmatpush1.bf16.xpose.msra.mxu0 0
      %497 = vmatprep.subr.bf16.mxu0 0
      %498 = vmatpush1.bf16.xpose.msra.mxu0 0
      %499 = vmatprep.subr.bf16.mxu0 0
      %500 = vmatpush1.bf16.xpose.msra.mxu0 0
      %501 = vmatprep.subr.bf16.mxu0 0
      %502 = vmatpush1.bf16.xpose.msra.mxu0 0
      %503 = vmatprep.subr.bf16.mxu0 0
      %504 = vmatpush1.bf16.xpose.msra.mxu0 0
      %505 = vmatprep.subr.bf16.mxu0 0
      %506 = vmatpush1.bf16.xpose.msra.mxu0 0
      %507 = vmatprep.subr.bf16.mxu0 0
      %508 = vmatpush1.bf16.xpose.msra.mxu0 0
      %509 = vmatprep.subr.bf16.mxu0 0
      %510 = vmatpush1.bf16.xpose.msra.mxu0 0
      %511 = vmatprep.subr.bf16.mxu0 0
      %512 = vmatpush1.bf16.xpose.msra.mxu0 0
      %513 = vmatprep.subr.bf16.mxu0 0
      %514 = vmatpush1.bf16.xpose.msra.mxu0 0
      %515 = vmatprep.subr.bf16.mxu0 0
      %516 = vmatpush1.bf16.xpose.msra.mxu0 0
      %517 = vmatprep.subr.bf16.mxu0 0
      %518 = vmatpush1.bf16.xpose.msra.mxu0 0
      %519 = vmatprep.subr.bf16.mxu0 0
      %520 = vmatpush1.bf16.xpose.msra.mxu0 0
      %521 = vmatprep.subr.bf16.mxu0 0
      %522 = vmatpush1.bf16.xpose.msra.mxu0 0
      %523 = vmatprep.mubr.bf16.mxu0 0
      %524 = vmatmul.mubr.bf16.gmra.mrb[0].mxu0 %v480
      %v525 = vpop.f32.mrb[0].mxu0
      %v526 = vadd.f32 0.0, %v525
      %v527 = vpop.f32.mrb[0].mxu0
      %v528 = vpop.f32.mrb[0].mxu0
      %v529 = vadd.f32 0.0, %v528
      %v530 = vpop.f32.mrb[0].mxu0
      %531 = vmatprep.mubr.bf16.mxu0 0
      %532 = vmatmul.mubr.bf16.gmra.mrb[0].mxu0 %v483
      %v533 = vpop.f32.mrb[0].mxu0
      %v534 = vadd.f32 0.0, %v533
      %v535 = vpop.f32.mrb[0].mxu0
      %v536 = vpop.f32.mrb[0].mxu0
      %v537 = vpop.f32.mrb[0].mxu0
      %538 = vdwg.mxu0
      %v539 = vsel %vm202, %v526, -inf
      %540 = vmax.xlane.f32.xlu0 %v539
      %v541 = vpop.xlane.xlu0 %540
      %v542 = vsel %vm202, %v529, -inf
      %543 = vmax.xlane.f32.xlu0 %v542
      %v544 = vpop.xlane.xlu0 %543
      %v545 = vsel %vm209, %v534, -inf
      %546 = vmax.xlane.f32.xlu0 %v545
      %v547 = vpop.xlane.xlu0 %546
      %v548 = vsub.f32 %v526, %v541
      %v549 = vsub.f32 %v529, %v544
      %v550 = vsub.f32 %v534, %v547
      %v551 = vmul.f32 %v548, 1.442695
      %v552 = vpow.pop %v551
      %v553 = vmul.f32 %v549, 1.442695
      %v554 = vpow.pop %v553
      %v555 = vmul.f32 %v550, 1.442695
      %v556 = vpow.pop %v555
      %v557 = vsel %vm202, %v552, 0.0
      %558 = vadd.xlane.f32.xlu0 %v557
      %v559 = vpop.xlane.xlu0 %558
      %v560 = vsel %vm202, %v554, 0.0
      %561 = vadd.xlane.f32.xlu0 %v560
      %v562 = vpop.xlane.xlu0 %561
      %v563 = vsel %vm209, %v556, 0.0
      %564 = vadd.xlane.f32.xlu0 %v563
      %v565 = vpop.xlane.xlu0 %564
      %v566 = vrcp.pop %v559
      %v567 = vrcp.pop %v562
      %v568 = vrcp.pop %v565
      %v569 = vmul.f32 %v552, %v566
      %v570 = vmul.f32 %v554, %v567
      %v571 = vmul.f32 %v556, %v568
      %v572 = vpack.c.bf16 %v570, %v569
      %v573 = vpack.c.bf16 %v571, %v571
      %574 = vrot.lane.b32.xlu0 %v135, 48
      %v575 = vpop.permute.xlu0 %574
      %576 = vrot.lane.b32.xlu0 %v136, 48
      %v577 = vpop.permute.xlu0 %576
      %v580 = vsel %vm202, %v572, 0
      %v583 = vsel %vm202, %v573, 0
      %v586 = vand.u32 %v577, %v252
      %588 = vmatprep.subr.bf16.mxu0 0
      %589 = vmatpush1.bf16.msra.mxu0 %v575
      %590 = vmatprep.subr.bf16.mxu0 0
      %591 = vmatpush1.bf16.msra.mxu0 %v586
      %592 = vmatprep.subr.bf16.mxu0 0
      %593 = vmatpush1.bf16.msra.mxu0 0
      %594 = vmatprep.subr.bf16.mxu0 0
      %595 = vmatpush1.bf16.msra.mxu0 0
      %596 = vmatprep.subr.bf16.mxu0 0
      %597 = vmatpush1.bf16.msra.mxu0 0
      %598 = vmatprep.subr.bf16.mxu0 0
      %599 = vmatpush1.bf16.msra.mxu0 0
      %600 = vmatprep.subr.bf16.mxu0 0
      %601 = vmatpush1.bf16.msra.mxu0 0
      %602 = vmatprep.subr.bf16.mxu0 0
      %603 = vmatpush1.bf16.msra.mxu0 0
      %604 = vmatprep.subr.bf16.mxu0 0
      %605 = vmatpush1.bf16.msra.mxu0 0
      %606 = vmatprep.subr.bf16.mxu0 0
      %607 = vmatpush1.bf16.msra.mxu0 0
      %608 = vmatprep.subr.bf16.mxu0 0
      %609 = vmatpush1.bf16.msra.mxu0 0
      %610 = vmatprep.subr.bf16.mxu0 0
      %611 = vmatpush1.bf16.msra.mxu0 0
      %612 = vmatprep.subr.bf16.mxu0 0
      %613 = vmatpush1.bf16.msra.mxu0 0
      %614 = vmatprep.subr.bf16.mxu0 0
      %615 = vmatpush1.bf16.msra.mxu0 0
      %616 = vmatprep.subr.bf16.mxu0 0
      %617 = vmatpush1.bf16.msra.mxu0 0
      %618 = vmatprep.subr.bf16.mxu0 0
      %619 = vmatpush1.bf16.msra.mxu0 0
      %620 = vmatprep.mubr.bf16.mxu0 0
      %621 = vmatmul.mubr.bf16.gmra.mrb[0].mxu0 %v580
      %v622 = vpop.f32.mrb[0].mxu0
      %v623 = vadd.f32 0.0, %v622
      %v624 = vpop.f32.mrb[0].mxu0
      %v625 = vpop.f32.mrb[0].mxu0
      %v626 = vadd.f32 0.0, %v625
      %v627 = vpop.f32.mrb[0].mxu0
      %628 = vmatprep.mubr.bf16.mxu0 0
      %629 = vmatmul.mubr.bf16.gmra.mrb[0].mxu0 %v583
      %v630 = vpop.f32.mrb[0].mxu0
      %v631 = vadd.f32 0.0, %v630
      %v632 = vpop.f32.mrb[0].mxu0
      %v633 = vpop.f32.mrb[0].mxu0
      %v634 = vpop.f32.mrb[0].mxu0
      %635 = vdwg.mxu0
      %636 = vrot.lane.b32.xlu0 %v127, 104
      %v637 = vpop.permute.xlu0 %636
      %638 = vrot.lane.b32.xlu0 %v128, 104
      %v639 = vpop.permute.xlu0 %638
      %640 = vrot.lane.b32.xlu0 %v135, 72
      %v641 = vpop.permute.xlu0 %640
      %642 = vrot.lane.b32.xlu0 %v136, 72
      %v643 = vpop.permute.xlu0 %642
      %v645 = vsel %vm141, %v637, 0
      %v648 = vsel %vm141, %v639, 0
      %v651 = vsel %vm141, %v641, 0
      %v654 = vsel %vm141, %v643, 0
      %656 = vmatprep.subr.bf16.mxu0 0
      %657 = vmatpush1.bf16.xpose.msra.mxu0 %v651
      %658 = vmatprep.subr.bf16.mxu0 0
      %659 = vmatpush1.bf16.xpose.msra.mxu0 %v654
      %660 = vmatprep.subr.bf16.mxu0 0
      %661 = vmatpush1.bf16.xpose.msra.mxu0 0
      %662 = vmatprep.subr.bf16.mxu0 0
      %663 = vmatpush1.bf16.xpose.msra.mxu0 0
      %664 = vmatprep.subr.bf16.mxu0 0
      %665 = vmatpush1.bf16.xpose.msra.mxu0 0
      %666 = vmatprep.subr.bf16.mxu0 0
      %667 = vmatpush1.bf16.xpose.msra.mxu0 0
      %668 = vmatprep.subr.bf16.mxu0 0
      %669 = vmatpush1.bf16.xpose.msra.mxu0 0
      %670 = vmatprep.subr.bf16.mxu0 0
      %671 = vmatpush1.bf16.xpose.msra.mxu0 0
      %672 = vmatprep.subr.bf16.mxu0 0
      %673 = vmatpush1.bf16.xpose.msra.mxu0 0
      %674 = vmatprep.subr.bf16.mxu0 0
      %675 = vmatpush1.bf16.xpose.msra.mxu0 0
      %676 = vmatprep.subr.bf16.mxu0 0
      %677 = vmatpush1.bf16.xpose.msra.mxu0 0
      %678 = vmatprep.subr.bf16.mxu0 0
      %679 = vmatpush1.bf16.xpose.msra.mxu0 0
      %680 = vmatprep.subr.bf16.mxu0 0
      %681 = vmatpush1.bf16.xpose.msra.mxu0 0
      %682 = vmatprep.subr.bf16.mxu0 0
      %683 = vmatpush1.bf16.xpose.msra.mxu0 0
      %684 = vmatprep.subr.bf16.mxu0 0
      %685 = vmatpush1.bf16.xpose.msra.mxu0 0
      %686 = vmatprep.subr.bf16.mxu0 0
      %687 = vmatpush1.bf16.xpose.msra.mxu0 0
      %688 = vmatprep.mubr.bf16.mxu0 0
      %689 = vmatmul.mubr.bf16.gmra.mrb[0].mxu0 %v645
      %v690 = vpop.f32.mrb[0].mxu0
      %v691 = vadd.f32 0.0, %v690
      %v692 = vpop.f32.mrb[0].mxu0
      %v693 = vpop.f32.mrb[0].mxu0
      %v694 = vadd.f32 0.0, %v693
      %v695 = vpop.f32.mrb[0].mxu0
      %696 = vmatprep.mubr.bf16.mxu0 0
      %697 = vmatmul.mubr.bf16.gmra.mrb[0].mxu0 %v648
      %v698 = vpop.f32.mrb[0].mxu0
      %v699 = vadd.f32 0.0, %v698
      %v700 = vpop.f32.mrb[0].mxu0
      %v701 = vpop.f32.mrb[0].mxu0
      %v702 = vpop.f32.mrb[0].mxu0
      %703 = vdwg.mxu0
      %v704 = vsel %vm202, %v691, -inf
      %705 = vmax.xlane.f32.xlu0 %v704
      %v706 = vpop.xlane.xlu0 %705
      %v707 = vsel %vm202, %v694, -inf
      %708 = vmax.xlane.f32.xlu0 %v707
      %v709 = vpop.xlane.xlu0 %708
      %v710 = vsel %vm209, %v699, -inf
      %711 = vmax.xlane.f32.xlu0 %v710
      %v712 = vpop.xlane.xlu0 %711
      %v713 = vsub.f32 %v691, %v706
      %v714 = vsub.f32 %v694, %v709
      %v715 = vsub.f32 %v699, %v712
      %v716 = vmul.f32 %v713, 1.442695
      %v717 = vpow.pop %v716
      %v718 = vmul.f32 %v714, 1.442695
      %v719 = vpow.pop %v718
      %v720 = vmul.f32 %v715, 1.442695
      %v721 = vpow.pop %v720
      %v722 = vsel %vm202, %v717, 0.0
      %723 = vadd.xlane.f32.xlu0 %v722
      %v724 = vpop.xlane.xlu0 %723
      %v725 = vsel %vm202, %v719, 0.0
      %726 = vadd.xlane.f32.xlu0 %v725
      %v727 = vpop.xlane.xlu0 %726
      %v728 = vsel %vm209, %v721, 0.0
      %729 = vadd.xlane.f32.xlu0 %v728
      %v730 = vpop.xlane.xlu0 %729
      %v731 = vrcp.pop %v724
      %v732 = vrcp.pop %v727
      %v733 = vrcp.pop %v730
      %v734 = vmul.f32 %v717, %v731
      %v735 = vmul.f32 %v719, %v732
      %v736 = vmul.f32 %v721, %v733
      %v737 = vpack.c.bf16 %v735, %v734
      %v738 = vpack.c.bf16 %v736, %v736
      %739 = vrot.lane.b32.xlu0 %v135, 40
      %v740 = vpop.permute.xlu0 %739
      %741 = vrot.lane.b32.xlu0 %v136, 40
      %v742 = vpop.permute.xlu0 %741
      %v745 = vsel %vm202, %v737, 0
      %v748 = vsel %vm202, %v738, 0
      %v751 = vand.u32 %v742, %v252
      %753 = vmatprep.subr.bf16.mxu0 0
      %754 = vmatpush1.bf16.msra.mxu0 %v740
      %755 = vmatprep.subr.bf16.mxu0 0
      %756 = vmatpush1.bf16.msra.mxu0 %v751
      %757 = vmatprep.subr.bf16.mxu0 0
      %758 = vmatpush1.bf16.msra.mxu0 0
      %759 = vmatprep.subr.bf16.mxu0 0
      %760 = vmatpush1.bf16.msra.mxu0 0
      %761 = vmatprep.subr.bf16.mxu0 0
      %762 = vmatpush1.bf16.msra.mxu0 0
      %763 = vmatprep.subr.bf16.mxu0 0
      %764 = vmatpush1.bf16.msra.mxu0 0
      %765 = vmatprep.subr.bf16.mxu0 0
      %766 = vmatpush1.bf16.msra.mxu0 0
      %767 = vmatprep.subr.bf16.mxu0 0
      %768 = vmatpush1.bf16.msra.mxu0 0
      %769 = vmatprep.subr.bf16.mxu0 0
      %770 = vmatpush1.bf16.msra.mxu0 0
      %771 = vmatprep.subr.bf16.mxu0 0
      %772 = vmatpush1.bf16.msra.mxu0 0
      %773 = vmatprep.subr.bf16.mxu0 0
      %774 = vmatpush1.bf16.msra.mxu0 0
      %775 = vmatprep.subr.bf16.mxu0 0
      %776 = vmatpush1.bf16.msra.mxu0 0
      %777 = vmatprep.subr.bf16.mxu0 0
      %778 = vmatpush1.bf16.msra.mxu0 0
      %779 = vmatprep.subr.bf16.mxu0 0
      %780 = vmatpush1.bf16.msra.mxu0 0
      %781 = vmatprep.subr.bf16.mxu0 0
      %782 = vmatpush1.bf16.msra.mxu0 0
      %783 = vmatprep.subr.bf16.mxu0 0
      %784 = vmatpush1.bf16.msra.mxu0 0
      %785 = vmatprep.mubr.bf16.mxu0 0
      %786 = vmatmul.mubr.bf16.gmra.mrb[0].mxu0 %v745
      %v787 = vpop.f32.mrb[0].mxu0
      %v788 = vadd.f32 0.0, %v787
      %v789 = vpop.f32.mrb[0].mxu0
      %v790 = vpop.f32.mrb[0].mxu0
      %v791 = vadd.f32 0.0, %v790
      %v792 = vpop.f32.mrb[0].mxu0
      %793 = vmatprep.mubr.bf16.mxu0 0
      %794 = vmatmul.mubr.bf16.gmra.mrb[0].mxu0 %v748
      %v795 = vpop.f32.mrb[0].mxu0
      %v796 = vadd.f32 0.0, %v795
      %v797 = vpop.f32.mrb[0].mxu0
      %v798 = vpop.f32.mrb[0].mxu0
      %v799 = vpop.f32.mrb[0].mxu0
      %800 = vdwg.mxu0
      %804 = vrot.lane.b32.xlu0 %v458, 8
      %v805 = vpop.permute.xlu0 %804
      %806 = vrot.lane.b32.xlu0 %v461, 8
      %v807 = vpop.permute.xlu0 %806
      %808 = vrot.lane.b32.xlu0 %v466, 8
      %v809 = vpop.permute.xlu0 %808
      %816 = vrot.lane.b32.xlu0 %v623, 16
      %v817 = vpop.permute.xlu0 %816
      %818 = vrot.lane.b32.xlu0 %v626, 16
      %v819 = vpop.permute.xlu0 %818
      %820 = vrot.lane.b32.xlu0 %v631, 16
      %v821 = vpop.permute.xlu0 %820
      %828 = vrot.lane.b32.xlu0 %v788, 24
      %v829 = vpop.permute.xlu0 %828
      %830 = vrot.lane.b32.xlu0 %v791, 24
      %v831 = vpop.permute.xlu0 %830
      %832 = vrot.lane.b32.xlu0 %v796, 24
      %v833 = vpop.permute.xlu0 %832
      %v837 = vsel %vm141, %v291, %v805
      %v838 = vsel %vm141, %v294, %v807
      %v839 = vsel %vm141, %v299, %v809
      %vm840 = vcmask 130048
      %v841 = vsel %vm840, %v837, %v817
      %v842 = vsel %vm840, %v838, %v819
      %v843 = vsel %vm840, %v839, %v821
      %vm844 = vcmask 195584
      %v845 = vsel %vm844, %v841, %v829
      %v846 = vsel %vm844, %v842, %v831
      %v847 = vsel %vm844, %v843, %v833
      %v848 = vpack.c.bf16 %v846, %v845
      %v849 = vpack.c.bf16 %v847, %v847
      %v852 = vunpack.c.l.b16 %v848
      %v853 = vunpack.c.h.b16 %v848
      %v854 = vunpack.c.l.b16 %v849
      %v855 = vpack.c.b16 %v852, %v852
      %v856 = vpack.c.b16 %v853, %v853
      %v857 = vpack.c.b16 %v854, %v854
      %vm861 = vcmask 257024
      %862 = vst.msk [vmem:[%s116] sm:$0xf] %vm861, %v855
      %863 = vst.msk [vmem:[%s116 + $0x4] sm:$0xf] %vm861, %v856
      %vm864 = vcmask 253952
      %vm865 = vsmask.f32 256
      %vm866 = vmand %vm864, %vm865
      %v867 = vld [vmem:[%s116 + $0x8] sm:$0x1]
      %v868 = vsel %vm866, %v857, %v867
      %869 = vst [vmem:[%s116 + $0x8] sm:$0x1] %v868
      %p870 = scmp.lt.s32.totalorder %s12, 1
      %s871 = scalar_select %p870, %s12, 1
      %s872 = smul.addr %s871, 3
      %s873 = smul.addr %s872, 4
      %s874 = scalar_lea.vmem %s1, %s873
      // Predicated region
      $region25: #{vit_forward.14} parent=23 // pred_check
        %p875 = pneg %p56
      $region26: #{vit_forward.14} parent=23 // pred_check_branch
        %877 = sbr.rel (%p875) target = $region28
      $region27: #{vit_forward.14} parent=23 // pred_region
        _
      $region28: #{vit_forward.14} parent=23 // pred_fallthru
        _
    $region24: #{vit_forward.14} parent=5 // pred_fallthru
      _
    %p878 = scmp.le.s32.totalorder 2, %s7
    // Predicated region
    $region29: #{vit_forward.14} parent=5 // pred_check
      %p879 = pneg %p878
    $region30: #{vit_forward.14} parent=5 // pred_check_branch
      %881 = sbr.rel (%p879) target = $region32
    $region31: #{vit_forward.14} parent=5 // pred_region
      %s882 = ssub.s32 %s7, 2
      // Predicated region
      $region33: #{vit_forward.14} parent=31 // pred_check
        %p883 = pneg %p62
      $region34: #{vit_forward.14} parent=31 // pred_check_branch
        %885 = sbr.rel (%p883) target = $region36
      $region35: #{vit_forward.14} parent=31 // pred_region
        %p886 = scmp.lt.s32.totalorder %s13, 1
        %s887 = scalar_select %p886, %s13, 1
        %s888 = smul.addr %s887, 3
        %s889 = smul.addr %s888, 4
        %s890 = scalar_lea.vmem %s1, %s889
      $region36: #{vit_forward.14} parent=31 // pred_fallthru
        _
    $region32: #{vit_forward.14} parent=5 // pred_fallthru
      _
  $region6: #{vit_forward.14} parent=0 // loop_footer
    %s11 = sadd.s32 1, %s7
  $region7: #{vit_forward.14} parent=0 // loop_footer_branch
    %6 = sbr.rel target = $region3
  $region8: #{vit_forward.14} parent=0 // loop_exit
    _

// kernel: vit_forward.15
$region0: #{vit_forward.15}
  #allocation0 [shape = 'u32[]', space=smem, size = 0x4, offset = 0x4, fixed_abs, tag = 'smem constant byte address 0x4 - core index']
  #allocation1 [shape = 'u32[144,128]{1,0:T(1,128)}', space=vmem, size = 0x12000, scoped, tag = 'internal scratch']
  #allocation2 [shape = 'f32[34,32]{1,0:T(8,128)}', space=vmem, size = 0x5000, scoped, tag = 'scratch operand']
  %s0 = inlined_call_operand.vmem [shape: bf16[34,32], index: 0, kind: input, shape index: {}]
  %s1 = inlined_call_operand.vmem [shape: bf16[32,32], index: 1, kind: input, shape index: {}]
  %s2 = inlined_call_operand.vmem [shape: f32[1,32], index: 2, kind: input, shape index: {}]
  %s3 = inlined_call_operand.vmem [shape: f32[34,32], index: 3, kind: input, shape index: {}]
  %s4 = inlined_call_operand.vmem [shape: f32[34,32], index: 4, kind: output, shape index: {}]
  %s5 = sld [smem:[#allocation0]]
  $region34: #{vit_forward.15} parent=0
    _
  %s7 = ssub.s32 1, %s5
  %s8 = scalar_select 0, %s7, %s5
  // Predicated region
  $region2: #{vit_forward.15} parent=0 // pred_check
    _
  $region3: #{vit_forward.15} parent=0 // pred_check_branch
    %10 = sbr.rel (0) target = $region5
  $region4: #{vit_forward.15} parent=0 // pred_region
    _
  $region5: #{vit_forward.15} parent=0 // pred_fallthru
    _
  // Predicated region
  $region6: #{vit_forward.15} parent=0 // pred_check
    _
  $region7: #{vit_forward.15} parent=0 // pred_check_branch
    %12 = sbr.rel (0) target = $region9
  $region8: #{vit_forward.15} parent=0 // pred_region
    _
  $region9: #{vit_forward.15} parent=0 // pred_fallthru
    _
  // Predicated region
  $region10: #{vit_forward.15} parent=0 // pred_check
    _
  $region11: #{vit_forward.15} parent=0 // pred_check_branch
    %14 = sbr.rel (0) target = $region13
  $region12: #{vit_forward.15} parent=0 // pred_region
    _
  $region13: #{vit_forward.15} parent=0 // pred_fallthru
    _
  // Predicated region
  $region14: #{vit_forward.15} parent=0 // pred_check
    _
  $region15: #{vit_forward.15} parent=0 // pred_check_branch
    %16 = sbr.rel (0) target = $region17
  $region16: #{vit_forward.15} parent=0 // pred_region
    _
  $region17: #{vit_forward.15} parent=0 // pred_fallthru
    _
  %p18 = scmp.eq.s32.totalorder 0, 0
  // Predicated region
  $region18: #{vit_forward.15} parent=0 // pred_check
    %p19 = pneg %p18
  $region19: #{vit_forward.15} parent=0 // pred_check_branch
    %21 = sbr.rel (%p19) target = $region21
  $region20: #{vit_forward.15} parent=0 // pred_region
    %vm22 = vcmask 261120
    %23 = vst.msk [vmem:[#allocation2] sm:$0xff] %vm22, 0.0
    %24 = vst.msk [vmem:[#allocation2 + $0x8] sm:$0xff] %vm22, 0.0
    %25 = vst.msk [vmem:[#allocation2 + $0x10] sm:$0xff] %vm22, 0.0
    %26 = vst.msk [vmem:[#allocation2 + $0x18] sm:$0xff] %vm22, 0.0
    %vm27 = vcmask 254976
    %28 = vst.msk [vmem:[#allocation2 + $0x20] sm:$0x3] %vm27, 0.0
  $region21: #{vit_forward.15} parent=0 // pred_fallthru
    _
  %v29 = vld [vmem:[#allocation2] sm:$0xff]
  %v30 = vld [vmem:[#allocation2 + $0x8] sm:$0xff]
  %v31 = vld [vmem:[#allocation2 + $0x10] sm:$0xff]
  %v32 = vld [vmem:[#allocation2 + $0x18] sm:$0xff]
  %v33 = vld [vmem:[#allocation2 + $0x20] sm:$0x3]
  %v34 = vld [vmem:[%s0] sm:$0xf]
  %v35 = vld [vmem:[%s0 + $0x4] sm:$0xf]
  %v36 = vld [vmem:[%s0 + $0x8] sm:$0xf]
  %v37 = vld [vmem:[%s0 + $0xc] sm:$0xf]
  %v38 = vld [vmem:[%s0 + $0x10] sm:$0x1]
  %v39 = vld [vmem:[%s1] sm:$0xf]
  %v40 = vld [vmem:[%s1 + $0x4] sm:$0xf]
  %v41 = vld [vmem:[%s1 + $0x8] sm:$0xf]
  %v42 = vld [vmem:[%s1 + $0xc] sm:$0xf]
  %v48 = vunpack.c.l.b16 %v34
  %v49 = vunpack.c.l.b16 %v35
  %v50 = vunpack.c.l.b16 %v36
  %v51 = vunpack.c.l.b16 %v37
  %v52 = vunpack.c.l.b16 %v38
  %v53 = vpack.c.b16 %v49, %v48
  %v54 = vpack.c.b16 %v51, %v50
  %v55 = vpack.c.b16 %v52, %v52
  %v60 = vunpack.c.l.b16 %v39
  %v61 = vunpack.c.l.b16 %v40
  %v62 = vunpack.c.l.b16 %v41
  %v63 = vunpack.c.l.b16 %v42
  %v64 = vpack.c.b16 %v61, %v60
  %v65 = vpack.c.b16 %v63, %v62
  %vm68 = vcmask 261120
  %v70 = vsel %vm68, %v53, 0
  %v73 = vsel %vm68, %v54, 0
  %v76 = vsel %vm68, %v55, 0
  %78 = vmatprep.subr.bf16.mxu0 0
  %79 = vmatpush1.bf16.msra.mxu0 %v64
  %80 = vmatprep.subr.bf16.mxu0 0
  %81 = vmatpush1.bf16.msra.mxu0 %v65
  %82 = vmatprep.subr.bf16.mxu0 0
  %83 = vmatpush1.bf16.msra.mxu0 0
  %84 = vmatprep.subr.bf16.mxu0 0
  %85 = vmatpush1.bf16.msra.mxu0 0
  %86 = vmatprep.subr.bf16.mxu0 0
  %87 = vmatpush1.bf16.msra.mxu0 0
  %88 = vmatprep.subr.bf16.mxu0 0
  %89 = vmatpush1.bf16.msra.mxu0 0
  %90 = vmatprep.subr.bf16.mxu0 0
  %91 = vmatpush1.bf16.msra.mxu0 0
  %92 = vmatprep.subr.bf16.mxu0 0
  %93 = vmatpush1.bf16.msra.mxu0 0
  %94 = vmatprep.subr.bf16.mxu0 0
  %95 = vmatpush1.bf16.msra.mxu0 0
  %96 = vmatprep.subr.bf16.mxu0 0
  %97 = vmatpush1.bf16.msra.mxu0 0
  %98 = vmatprep.subr.bf16.mxu0 0
  %99 = vmatpush1.bf16.msra.mxu0 0
  %100 = vmatprep.subr.bf16.mxu0 0
  %101 = vmatpush1.bf16.msra.mxu0 0
  %102 = vmatprep.subr.bf16.mxu0 0
  %103 = vmatpush1.bf16.msra.mxu0 0
  %104 = vmatprep.subr.bf16.mxu0 0
  %105 = vmatpush1.bf16.msra.mxu0 0
  %106 = vmatprep.subr.bf16.mxu0 0
  %107 = vmatpush1.bf16.msra.mxu0 0
  %108 = vmatprep.subr.bf16.mxu0 0
  %109 = vmatpush1.bf16.msra.mxu0 0
  %110 = vmatprep.mubr.bf16.mxu0 0
  %111 = vmatmul.mubr.bf16.gmra.mrb[0].mxu0 %v70
  %v112 = vpop.f32.mrb[0].mxu0
  %v113 = vadd.f32 0.0, %v112
  %v114 = vpop.f32.mrb[0].mxu0
  %v115 = vpop.f32.mrb[0].mxu0
  %v116 = vadd.f32 0.0, %v115
  %v117 = vpop.f32.mrb[0].mxu0
  %118 = vmatprep.mubr.bf16.mxu0 0
  %119 = vmatmul.mubr.bf16.gmra.mrb[0].mxu0 %v73
  %v120 = vpop.f32.mrb[0].mxu0
  %v121 = vadd.f32 0.0, %v120
  %v122 = vpop.f32.mrb[0].mxu0
  %v123 = vpop.f32.mrb[0].mxu0
  %v124 = vadd.f32 0.0, %v123
  %v125 = vpop.f32.mrb[0].mxu0
  %126 = vmatprep.mubr.bf16.mxu0 0
  %127 = vmatmul.mubr.bf16.gmra.mrb[0].mxu0 %v76
  %v128 = vpop.f32.mrb[0].mxu0
  %v129 = vadd.f32 0.0, %v128
  %v130 = vpop.f32.mrb[0].mxu0
  %v131 = vpop.f32.mrb[0].mxu0
  %v132 = vpop.f32.mrb[0].mxu0
  %133 = vdwg.mxu0
  %v134 = vadd.f32 %v29, %v113
  %v135 = vadd.f32 %v30, %v116
  %v136 = vadd.f32 %v31, %v121
  %v137 = vadd.f32 %v32, %v124
  %v138 = vadd.f32 %v33, %v129
  %139 = vst.msk [vmem:[#allocation2] sm:$0xff] %vm68, %v134
  %140 = vst.msk [vmem:[#allocation2 + $0x8] sm:$0xff] %vm68, %v135
  %141 = vst.msk [vmem:[#allocation2 + $0x10] sm:$0xff] %vm68, %v136
  %142 = vst.msk [vmem:[#allocation2 + $0x18] sm:$0xff] %vm68, %v137
  %vm143 = vcmask 254976
  %144 = vst.msk [vmem:[#allocation2 + $0x20] sm:$0x3] %vm143, %v138
  // Predicated region
  $region22: #{vit_forward.15} parent=0 // pred_check
    %p145 = pneg %p18
  $region23: #{vit_forward.15} parent=0 // pred_check_branch
    %147 = sbr.rel (%p145) target = $region25
  $region24: #{vit_forward.15} parent=0 // pred_region
    %v148 = vld [vmem:[#allocation2] sm:$0xff]
    %v149 = vld [vmem:[#allocation2 + $0x8] sm:$0xff]
    %v150 = vld [vmem:[#allocation2 + $0x10] sm:$0xff]
    %v151 = vld [vmem:[#allocation2 + $0x18] sm:$0xff]
    %v152 = vld [vmem:[#allocation2 + $0x20] sm:$0x3]
    %v153 = vld [vmem:[%s2] sm:$0x1]
    %v155 = vlaneseq
    %v156 = vshrl.u32 %v155, 7
    %v157 = vsub.s32 0, %v156
    %v158 = vrot.slane %v153, %v157
    %v160 = vadd.f32 %v148, %v158
    %v161 = vadd.f32 %v149, %v158
    %v162 = vadd.f32 %v150, %v158
    %v163 = vadd.f32 %v151, %v158
    %v164 = vadd.f32 %v152, %v158
    %v165 = vld [vmem:[%s3] sm:$0xff]
    %v166 = vld [vmem:[%s3 + $0x8] sm:$0xff]
    %v167 = vld [vmem:[%s3 + $0x10] sm:$0xff]
    %v168 = vld [vmem:[%s3 + $0x18] sm:$0xff]
    %v169 = vld [vmem:[%s3 + $0x20] sm:$0x3]
    %v170 = vadd.f32 %v160, %v165
    %v171 = vadd.f32 %v161, %v166
    %v172 = vadd.f32 %v162, %v167
    %v173 = vadd.f32 %v163, %v168
    %v174 = vadd.f32 %v164, %v169
    %175 = vst.msk [vmem:[%s4] sm:$0xff] %vm68, %v170
    %176 = vst.msk [vmem:[%s4 + $0x8] sm:$0xff] %vm68, %v171
    %177 = vst.msk [vmem:[%s4 + $0x10] sm:$0xff] %vm68, %v172
    %178 = vst.msk [vmem:[%s4 + $0x18] sm:$0xff] %vm68, %v173
    %179 = vst.msk [vmem:[%s4 + $0x20] sm:$0x3] %vm143, %v174
  $region25: #{vit_forward.15} parent=0 // pred_fallthru
    _
  // Predicated region
  $region26: #{vit_forward.15} parent=0 // pred_check
    _
  $region27: #{vit_forward.15} parent=0 // pred_check_branch
    %181 = sbr.rel (0) target = $region29
  $region28: #{vit_forward.15} parent=0 // pred_region
    _
  $region29: #{vit_forward.15} parent=0 // pred_fallthru
    _
  // Predicated region
  $region30: #{vit_forward.15} parent=0 // pred_check
    _
  $region31: #{vit_forward.15} parent=0 // pred_check_branch
    %183 = sbr.rel (0) target = $region33
  $region32: #{vit_forward.15} parent=0 // pred_region
    _
  $region33: #{vit_forward.15} parent=0 // pred_fallthru
    _

// kernel: vit_forward.16
$region0: #{vit_forward.16}
  #allocation0 [shape = 'u32[]', space=smem, size = 0x4, offset = 0x4, fixed_abs, tag = 'smem constant byte address 0x4 - core index']
  #allocation1 [shape = 'u32[144,128]{1,0:T(1,128)}', space=vmem, size = 0x12000, scoped, tag = 'internal scratch']
  %s0 = inlined_call_operand.vmem [shape: f32[34,32], index: 0, kind: input, shape index: {}]
  %s1 = inlined_call_operand.vmem [shape: f32[1,32], index: 1, kind: input, shape index: {}]
  %s2 = inlined_call_operand.vmem [shape: f32[1,32], index: 2, kind: input, shape index: {}]
  %s3 = inlined_call_operand.vmem [shape: bf16[32,64], index: 3, kind: input, shape index: {}]
  %s4 = inlined_call_operand.vmem [shape: f32[1,64], index: 4, kind: input, shape index: {}]
  %s5 = inlined_call_operand.vmem [shape: bf16[34,64], index: 5, kind: output, shape index: {}]
  %s6 = sld [smem:[#allocation0]]
  $region30: #{vit_forward.16} parent=0
    _
  %s8 = ssub.s32 1, %s6
  %s9 = scalar_select 0, %s8, %s6
  // Predicated region
  $region2: #{vit_forward.16} parent=0 // pred_check
    _
  $region3: #{vit_forward.16} parent=0 // pred_check_branch
    %11 = sbr.rel (0) target = $region5
  $region4: #{vit_forward.16} parent=0 // pred_region
    _
  $region5: #{vit_forward.16} parent=0 // pred_fallthru
    _
  // Predicated region
  $region6: #{vit_forward.16} parent=0 // pred_check
    _
  $region7: #{vit_forward.16} parent=0 // pred_check_branch
    %13 = sbr.rel (0) target = $region9
  $region8: #{vit_forward.16} parent=0 // pred_region
    _
  $region9: #{vit_forward.16} parent=0 // pred_fallthru
    _
  // Predicated region
  $region10: #{vit_forward.16} parent=0 // pred_check
    _
  $region11: #{vit_forward.16} parent=0 // pred_check_branch
    %15 = sbr.rel (0) target = $region13
  $region12: #{vit_forward.16} parent=0 // pred_region
    _
  $region13: #{vit_forward.16} parent=0 // pred_fallthru
    _
  // Predicated region
  $region14: #{vit_forward.16} parent=0 // pred_check
    _
  $region15: #{vit_forward.16} parent=0 // pred_check_branch
    %17 = sbr.rel (0) target = $region17
  $region16: #{vit_forward.16} parent=0 // pred_region
    _
  $region17: #{vit_forward.16} parent=0 // pred_fallthru
    _
  // Predicated region
  $region18: #{vit_forward.16} parent=0 // pred_check
    _
  $region19: #{vit_forward.16} parent=0 // pred_check_branch
    %19 = sbr.rel (0) target = $region21
  $region20: #{vit_forward.16} parent=0 // pred_region
    _
  $region21: #{vit_forward.16} parent=0 // pred_fallthru
    _
  %v21 = vld [vmem:[%s0] sm:$0xff]
  %v22 = vld [vmem:[%s0 + $0x8] sm:$0xff]
  %v23 = vld [vmem:[%s0 + $0x10] sm:$0xff]
  %v24 = vld [vmem:[%s0 + $0x18] sm:$0xff]
  %v25 = vld [vmem:[%s0 + $0x20] sm:$0x3]
  %vm26 = vcmask 261120
  %v27 = vsel %vm26, %v21, 0.0
  %28 = vadd.xlane.f32.xlu0 %v27
  %v29 = vpop.xlane.xlu0 %28
  %v30 = vsel %vm26, %v22, 0.0
  %31 = vadd.xlane.f32.xlu0 %v30
  %v32 = vpop.xlane.xlu0 %31
  %v33 = vsel %vm26, %v23, 0.0
  %34 = vadd.xlane.f32.xlu0 %v33
  %v35 = vpop.xlane.xlu0 %34
  %v36 = vsel %vm26, %v24, 0.0
  %37 = vadd.xlane.f32.xlu0 %v36
  %v38 = vpop.xlane.xlu0 %37
  %vm39 = vcmask 254976
  %v40 = vsel %vm39, %v25, 0.0
  %41 = vadd.xlane.f32.xlu0 %v40
  %v42 = vpop.xlane.xlu0 %41
  %v43 = vrcp.pop 32.0
  %v44 = vmul.f32 %v29, %v43
  %v45 = vmul.f32 %v32, %v43
  %v46 = vmul.f32 %v35, %v43
  %v47 = vmul.f32 %v38, %v43
  %v48 = vmul.f32 %v42, %v43
  %v49 = vsub.f32 %v21, %v44
  %v50 = vsub.f32 %v22, %v45
  %v51 = vsub.f32 %v23, %v46
  %v52 = vsub.f32 %v24, %v47
  %v53 = vsub.f32 %v25, %v48
  %v54 = vmul.f32 %v49, %v49
  %v55 = vmul.f32 %v50, %v50
  %v56 = vmul.f32 %v51, %v51
  %v57 = vmul.f32 %v52, %v52
  %v58 = vmul.f32 %v53, %v53
  %v59 = vsel %vm26, %v54, 0.0
  %60 = vadd.xlane.f32.xlu0 %v59
  %v61 = vpop.xlane.xlu0 %60
  %v62 = vsel %vm26, %v55, 0.0
  %63 = vadd.xlane.f32.xlu0 %v62
  %v64 = vpop.xlane.xlu0 %63
  %v65 = vsel %vm26, %v56, 0.0
  %66 = vadd.xlane.f32.xlu0 %v65
  %v67 = vpop.xlane.xlu0 %66
  %v68 = vsel %vm26, %v57, 0.0
  %69 = vadd.xlane.f32.xlu0 %v68
  %v70 = vpop.xlane.xlu0 %69
  %v71 = vsel %vm39, %v58, 0.0
  %72 = vadd.xlane.f32.xlu0 %v71
  %v73 = vpop.xlane.xlu0 %72
  %v74 = vmul.f32 %v61, %v43
  %v75 = vmul.f32 %v64, %v43
  %v76 = vmul.f32 %v67, %v43
  %v77 = vmul.f32 %v70, %v43
  %v78 = vmul.f32 %v73, %v43
  %v79 = vadd.f32 %v74, 1e-06
  %v80 = vadd.f32 %v75, 1e-06
  %v81 = vadd.f32 %v76, 1e-06
  %v82 = vadd.f32 %v77, 1e-06
  %v83 = vadd.f32 %v78, 1e-06
  %v84 = vrsqrt.pop %v79
  %v85 = vrsqrt.pop %v80
  %v86 = vrsqrt.pop %v81
  %v87 = vrsqrt.pop %v82
  %v88 = vrsqrt.pop %v83
  %v89 = vmul.f32 %v49, %v84
  %v90 = vmul.f32 %v50, %v85
  %v91 = vmul.f32 %v51, %v86
  %v92 = vmul.f32 %v52, %v87
  %v93 = vmul.f32 %v53, %v88
  %v94 = vld [vmem:[%s1] sm:$0x1]
  %v96 = vlaneseq
  %v97 = vshrl.u32 %v96, 7
  %v98 = vsub.s32 0, %v97
  %v99 = vrot.slane %v94, %v98
  %v101 = vmul.f32 %v89, %v99
  %v102 = vmul.f32 %v90, %v99
  %v103 = vmul.f32 %v91, %v99
  %v104 = vmul.f32 %v92, %v99
  %v105 = vmul.f32 %v93, %v99
  %v106 = vld [vmem:[%s2] sm:$0x1]
  %v108 = vlaneseq
  %v109 = vshrl.u32 %v108, 7
  %v110 = vsub.s32 0, %v109
  %v111 = vrot.slane %v106, %v110
  %v113 = vadd.f32 %v101, %v111
  %v114 = vadd.f32 %v102, %v111
  %v115 = vadd.f32 %v103, %v111
  %v116 = vadd.f32 %v104, %v111
  %v117 = vadd.f32 %v105, %v111
  %v118 = vpack.c.bf16 %v114, %v113
  %v119 = vpack.c.bf16 %v116, %v115
  %v120 = vpack.c.bf16 %v117, %v117
  %v121 = vld [vmem:[%s3] sm:$0xf]
  %v122 = vld [vmem:[%s3 + $0x4] sm:$0xf]
  %v123 = vld [vmem:[%s3 + $0x8] sm:$0xf]
  %v124 = vld [vmem:[%s3 + $0xc] sm:$0xf]
  %v125 = vld [vmem:[%s4] sm:$0x1]
  %v127 = vlaneseq
  %v128 = vshrl.u32 %v127, 7
  %v129 = vsub.s32 0, %v128
  %v130 = vrot.slane %v125, %v129
  %v136 = vunpack.c.l.b16 %v121
  %v137 = vunpack.c.l.b16 %v122
  %v138 = vunpack.c.l.b16 %v123
  %v139 = vunpack.c.l.b16 %v124
  %v140 = vpack.c.b16 %v137, %v136
  %v141 = vpack.c.b16 %v139, %v138
  %v145 = vsel %vm26, %v118, 0
  %v148 = vsel %vm26, %v119, 0
  %v151 = vsel %vm26, %v120, 0
  %153 = vmatprep.subr.bf16.mxu0 0
  %154 = vmatpush1.bf16.msra.mxu0 %v140
  %155 = vmatprep.subr.bf16.mxu0 0
  %156 = vmatpush1.bf16.msra.mxu0 %v141
  %157 = vmatprep.subr.bf16.mxu0 0
  %158 = vmatpush1.bf16.msra.mxu0 0
  %159 = vmatprep.subr.bf16.mxu0 0
  %160 = vmatpush1.bf16.msra.mxu0 0
  %161 = vmatprep.subr.bf16.mxu0 0
  %162 = vmatpush1.bf16.msra.mxu0 0
  %163 = vmatprep.subr.bf16.mxu0 0
  %164 = vmatpush1.bf16.msra.mxu0 0
  %165 = vmatprep.subr.bf16.mxu0 0
  %166 = vmatpush1.bf16.msra.mxu0 0
  %167 = vmatprep.subr.bf16.mxu0 0
  %168 = vmatpush1.bf16.msra.mxu0 0
  %169 = vmatprep.subr.bf16.mxu0 0
  %170 = vmatpush1.bf16.msra.mxu0 0
  %171 = vmatprep.subr.bf16.mxu0 0
  %172 = vmatpush1.bf16.msra.mxu0 0
  %173 = vmatprep.subr.bf16.mxu0 0
  %174 = vmatpush1.bf16.msra.mxu0 0
  %175 = vmatprep.subr.bf16.mxu0 0
  %176 = vmatpush1.bf16.msra.mxu0 0
  %177 = vmatprep.subr.bf16.mxu0 0
  %178 = vmatpush1.bf16.msra.mxu0 0
  %179 = vmatprep.subr.bf16.mxu0 0
  %180 = vmatpush1.bf16.msra.mxu0 0
  %181 = vmatprep.subr.bf16.mxu0 0
  %182 = vmatpush1.bf16.msra.mxu0 0
  %183 = vmatprep.subr.bf16.mxu0 0
  %184 = vmatpush1.bf16.msra.mxu0 0
  %185 = vmatprep.mubr.bf16.mxu0 0
  %186 = vmatmul.mubr.bf16.gmra.mrb[0].mxu0 %v145
  %v187 = vpop.f32.mrb[0].mxu0
  %v188 = vadd.f32 %v130, %v187
  %v189 = vpop.f32.mrb[0].mxu0
  %v190 = vpop.f32.mrb[0].mxu0
  %v191 = vadd.f32 %v130, %v190
  %v192 = vpop.f32.mrb[0].mxu0
  %193 = vmatprep.mubr.bf16.mxu0 0
  %194 = vmatmul.mubr.bf16.gmra.mrb[0].mxu0 %v148
  %v195 = vpop.f32.mrb[0].mxu0
  %v196 = vadd.f32 %v130, %v195
  %v197 = vpop.f32.mrb[0].mxu0
  %v198 = vpop.f32.mrb[0].mxu0
  %v199 = vadd.f32 %v130, %v198
  %v200 = vpop.f32.mrb[0].mxu0
  %201 = vmatprep.mubr.bf16.mxu0 0
  %202 = vmatmul.mubr.bf16.gmra.mrb[0].mxu0 %v151
  %v203 = vpop.f32.mrb[0].mxu0
  %v204 = vadd.f32 %v130, %v203
  %v205 = vpop.f32.mrb[0].mxu0
  %v206 = vpop.f32.mrb[0].mxu0
  %v207 = vpop.f32.mrb[0].mxu0
  %208 = vdwg.mxu0
  %v209 = vmul.f32 %v188, %v188
  %v210 = vmul.f32 %v191, %v191
  %v211 = vmul.f32 %v196, %v196
  %v212 = vmul.f32 %v199, %v199
  %v213 = vmul.f32 %v204, %v204
  %v214 = vmul.f32 %v188, %v209
  %v215 = vmul.f32 %v191, %v210
  %v216 = vmul.f32 %v196, %v211
  %v217 = vmul.f32 %v199, %v212
  %v218 = vmul.f32 %v204, %v213
  %v219 = vmul.f32 %v214, 0.044715
  %v220 = vmul.f32 %v215, 0.044715
  %v221 = vmul.f32 %v216, 0.044715
  %v222 = vmul.f32 %v217, 0.044715
  %v223 = vmul.f32 %v218, 0.044715
  %v224 = vadd.f32 %v188, %v219
  %v225 = vadd.f32 %v191, %v220
  %v226 = vadd.f32 %v196, %v221
  %v227 = vadd.f32 %v199, %v222
  %v228 = vadd.f32 %v204, %v223
  %v229 = vmul.f32 %v224, 0.7978846
  %v230 = vmul.f32 %v225, 0.7978846
  %v231 = vmul.f32 %v226, 0.7978846
  %v232 = vmul.f32 %v227, 0.7978846
  %v233 = vmul.f32 %v228, 0.7978846
  %v234 = vtanh.pop %v229
  %v235 = vtanh.pop %v230
  %v236 = vtanh.pop %v231
  %v237 = vtanh.pop %v232
  %v238 = vtanh.pop %v233
  %v239 = vadd.f32 %v234, 1.0
  %v240 = vadd.f32 %v235, 1.0
  %v241 = vadd.f32 %v236, 1.0
  %v242 = vadd.f32 %v237, 1.0
  %v243 = vadd.f32 %v238, 1.0
  %v244 = vmul.f32 %v239, 0.5
  %v245 = vmul.f32 %v240, 0.5
  %v246 = vmul.f32 %v241, 0.5
  %v247 = vmul.f32 %v242, 0.5
  %v248 = vmul.f32 %v243, 0.5
  %v249 = vmul.f32 %v188, %v244
  %v250 = vmul.f32 %v191, %v245
  %v251 = vmul.f32 %v196, %v246
  %v252 = vmul.f32 %v199, %v247
  %v253 = vmul.f32 %v204, %v248
  %v254 = vpack.c.bf16 %v250, %v249
  %v255 = vpack.c.bf16 %v252, %v251
  %v256 = vpack.c.bf16 %v253, %v253
  %v260 = vunpack.c.l.b16 %v254
  %v261 = vunpack.c.h.b16 %v254
  %v262 = vunpack.c.l.b16 %v255
  %v263 = vunpack.c.h.b16 %v255
  %v264 = vunpack.c.l.b16 %v256
  %v265 = vpack.c.b16 %v260, %v260
  %v266 = vpack.c.b16 %v261, %v261
  %v267 = vpack.c.b16 %v262, %v262
  %v268 = vpack.c.b16 %v263, %v263
  %v269 = vpack.c.b16 %v264, %v264
  %vm275 = vcmask 519168
  %276 = vst.msk [vmem:[%s5] sm:$0xf] %vm275, %v265
  %277 = vst.msk [vmem:[%s5 + $0x4] sm:$0xf] %vm275, %v266
  %278 = vst.msk [vmem:[%s5 + $0x8] sm:$0xf] %vm275, %v267
  %279 = vst.msk [vmem:[%s5 + $0xc] sm:$0xf] %vm275, %v268
  %vm280 = vcmask 516096
  %281 = vst.msk [vmem:[%s5 + $0x10] sm:$0x1] %vm280, %v269
  // Predicated region
  $region22: #{vit_forward.16} parent=0 // pred_check
    _
  $region23: #{vit_forward.16} parent=0 // pred_check_branch
    %283 = sbr.rel (0) target = $region25
  $region24: #{vit_forward.16} parent=0 // pred_region
    _
  $region25: #{vit_forward.16} parent=0 // pred_fallthru
    _
  // Predicated region
  $region26: #{vit_forward.16} parent=0 // pred_check
    _
  $region27: #{vit_forward.16} parent=0 // pred_check_branch
    %285 = sbr.rel (0) target = $region29
  $region28: #{vit_forward.16} parent=0 // pred_region
    _
  $region29: #{vit_forward.16} parent=0 // pred_fallthru
    _

// kernel: vit_forward.17
$region0: #{vit_forward.17}
  #allocation0 [shape = 'u32[]', space=smem, size = 0x4, offset = 0x4, fixed_abs, tag = 'smem constant byte address 0x4 - core index']
  #allocation1 [shape = 'u32[144,128]{1,0:T(1,128)}', space=vmem, size = 0x12000, scoped, tag = 'internal scratch']
  #allocation2 [shape = 'f32[34,32]{1,0:T(8,128)}', space=vmem, size = 0x5000, scoped, tag = 'scratch operand']
  %s0 = inlined_call_operand.vmem [shape: bf16[34,64], index: 0, kind: input, shape index: {}]
  %s1 = inlined_call_operand.vmem [shape: bf16[64,32], index: 1, kind: input, shape index: {}]
  %s2 = inlined_call_operand.vmem [shape: f32[1,32], index: 2, kind: input, shape index: {}]
  %s3 = inlined_call_operand.vmem [shape: f32[34,32], index: 3, kind: input, shape index: {}]
  %s4 = inlined_call_operand.vmem [shape: f32[34,32], index: 4, kind: output, shape index: {}]
  %s5 = sld [smem:[#allocation0]]
  $region34: #{vit_forward.17} parent=0
    _
  %s7 = ssub.s32 1, %s5
  %s8 = scalar_select 0, %s7, %s5
  // Predicated region
  $region2: #{vit_forward.17} parent=0 // pred_check
    _
  $region3: #{vit_forward.17} parent=0 // pred_check_branch
    %10 = sbr.rel (0) target = $region5
  $region4: #{vit_forward.17} parent=0 // pred_region
    _
  $region5: #{vit_forward.17} parent=0 // pred_fallthru
    _
  // Predicated region
  $region6: #{vit_forward.17} parent=0 // pred_check
    _
  $region7: #{vit_forward.17} parent=0 // pred_check_branch
    %12 = sbr.rel (0) target = $region9
  $region8: #{vit_forward.17} parent=0 // pred_region
    _
  $region9: #{vit_forward.17} parent=0 // pred_fallthru
    _
  // Predicated region
  $region10: #{vit_forward.17} parent=0 // pred_check
    _
  $region11: #{vit_forward.17} parent=0 // pred_check_branch
    %14 = sbr.rel (0) target = $region13
  $region12: #{vit_forward.17} parent=0 // pred_region
    _
  $region13: #{vit_forward.17} parent=0 // pred_fallthru
    _
  // Predicated region
  $region14: #{vit_forward.17} parent=0 // pred_check
    _
  $region15: #{vit_forward.17} parent=0 // pred_check_branch
    %16 = sbr.rel (0) target = $region17
  $region16: #{vit_forward.17} parent=0 // pred_region
    _
  $region17: #{vit_forward.17} parent=0 // pred_fallthru
    _
  %p18 = scmp.eq.s32.totalorder 0, 0
  // Predicated region
  $region18: #{vit_forward.17} parent=0 // pred_check
    %p19 = pneg %p18
  $region19: #{vit_forward.17} parent=0 // pred_check_branch
    %21 = sbr.rel (%p19) target = $region21
  $region20: #{vit_forward.17} parent=0 // pred_region
    %vm22 = vcmask 261120
    %23 = vst.msk [vmem:[#allocation2] sm:$0xff] %vm22, 0.0
    %24 = vst.msk [vmem:[#allocation2 + $0x8] sm:$0xff] %vm22, 0.0
    %25 = vst.msk [vmem:[#allocation2 + $0x10] sm:$0xff] %vm22, 0.0
    %26 = vst.msk [vmem:[#allocation2 + $0x18] sm:$0xff] %vm22, 0.0
    %vm27 = vcmask 254976
    %28 = vst.msk [vmem:[#allocation2 + $0x20] sm:$0x3] %vm27, 0.0
  $region21: #{vit_forward.17} parent=0 // pred_fallthru
    _
  %v29 = vld [vmem:[#allocation2] sm:$0xff]
  %v30 = vld [vmem:[#allocation2 + $0x8] sm:$0xff]
  %v31 = vld [vmem:[#allocation2 + $0x10] sm:$0xff]
  %v32 = vld [vmem:[#allocation2 + $0x18] sm:$0xff]
  %v33 = vld [vmem:[#allocation2 + $0x20] sm:$0x3]
  %v34 = vld [vmem:[%s0] sm:$0xf]
  %v35 = vld [vmem:[%s0 + $0x4] sm:$0xf]
  %v36 = vld [vmem:[%s0 + $0x8] sm:$0xf]
  %v37 = vld [vmem:[%s0 + $0xc] sm:$0xf]
  %v38 = vld [vmem:[%s0 + $0x10] sm:$0x1]
  %v39 = vld [vmem:[%s1] sm:$0xf]
  %v40 = vld [vmem:[%s1 + $0x4] sm:$0xf]
  %v41 = vld [vmem:[%s1 + $0x8] sm:$0xf]
  %v42 = vld [vmem:[%s1 + $0xc] sm:$0xf]
  %v43 = vld [vmem:[%s1 + $0x10] sm:$0xf]
  %v44 = vld [vmem:[%s1 + $0x14] sm:$0xf]
  %v45 = vld [vmem:[%s1 + $0x18] sm:$0xf]
  %v46 = vld [vmem:[%s1 + $0x1c] sm:$0xf]
  %v52 = vunpack.c.l.b16 %v34
  %v53 = vunpack.c.l.b16 %v35
  %v54 = vunpack.c.l.b16 %v36
  %v55 = vunpack.c.l.b16 %v37
  %v56 = vunpack.c.l.b16 %v38
  %v57 = vpack.c.b16 %v53, %v52
  %v58 = vpack.c.b16 %v55, %v54
  %v59 = vpack.c.b16 %v56, %v56
  %v68 = vunpack.c.l.b16 %v39
  %v69 = vunpack.c.l.b16 %v40
  %v70 = vunpack.c.l.b16 %v41
  %v71 = vunpack.c.l.b16 %v42
  %v72 = vunpack.c.l.b16 %v43
  %v73 = vunpack.c.l.b16 %v44
  %v74 = vunpack.c.l.b16 %v45
  %v75 = vunpack.c.l.b16 %v46
  %v76 = vpack.c.b16 %v69, %v68
  %v77 = vpack.c.b16 %v71, %v70
  %v78 = vpack.c.b16 %v73, %v72
  %v79 = vpack.c.b16 %v75, %v74
  %vm84 = vcmask 523264
  %v86 = vsel %vm84, %v57, 0
  %v89 = vsel %vm84, %v58, 0
  %v92 = vsel %vm84, %v59, 0
  %94 = vmatprep.subr.bf16.mxu0 0
  %95 = vmatpush1.bf16.msra.mxu0 %v76
  %96 = vmatprep.subr.bf16.mxu0 0
  %97 = vmatpush1.bf16.msra.mxu0 %v77
  %98 = vmatprep.subr.bf16.mxu0 0
  %99 = vmatpush1.bf16.msra.mxu0 %v78
  %100 = vmatprep.subr.bf16.mxu0 0
  %101 = vmatpush1.bf16.msra.mxu0 %v79
  %102 = vmatprep.subr.bf16.mxu0 0
  %103 = vmatpush1.bf16.msra.mxu0 0
  %104 = vmatprep.subr.bf16.mxu0 0
  %105 = vmatpush1.bf16.msra.mxu0 0
  %106 = vmatprep.subr.bf16.mxu0 0
  %107 = vmatpush1.bf16.msra.mxu0 0
  %108 = vmatprep.subr.bf16.mxu0 0
  %109 = vmatpush1.bf16.msra.mxu0 0
  %110 = vmatprep.subr.bf16.mxu0 0
  %111 = vmatpush1.bf16.msra.mxu0 0
  %112 = vmatprep.subr.bf16.mxu0 0
  %113 = vmatpush1.bf16.msra.mxu0 0
  %114 = vmatprep.subr.bf16.mxu0 0
  %115 = vmatpush1.bf16.msra.mxu0 0
  %116 = vmatprep.subr.bf16.mxu0 0
  %117 = vmatpush1.bf16.msra.mxu0 0
  %118 = vmatprep.subr.bf16.mxu0 0
  %119 = vmatpush1.bf16.msra.mxu0 0
  %120 = vmatprep.subr.bf16.mxu0 0
  %121 = vmatpush1.bf16.msra.mxu0 0
  %122 = vmatprep.subr.bf16.mxu0 0
  %123 = vmatpush1.bf16.msra.mxu0 0
  %124 = vmatprep.subr.bf16.mxu0 0
  %125 = vmatpush1.bf16.msra.mxu0 0
  %126 = vmatprep.mubr.bf16.mxu0 0
  %127 = vmatmul.mubr.bf16.gmra.mrb[0].mxu0 %v86
  %v128 = vpop.f32.mrb[0].mxu0
  %v129 = vadd.f32 0.0, %v128
  %v130 = vpop.f32.mrb[0].mxu0
  %v131 = vpop.f32.mrb[0].mxu0
  %v132 = vadd.f32 0.0, %v131
  %v133 = vpop.f32.mrb[0].mxu0
  %134 = vmatprep.mubr.bf16.mxu0 0
  %135 = vmatmul.mubr.bf16.gmra.mrb[0].mxu0 %v89
  %v136 = vpop.f32.mrb[0].mxu0
  %v137 = vadd.f32 0.0, %v136
  %v138 = vpop.f32.mrb[0].mxu0
  %v139 = vpop.f32.mrb[0].mxu0
  %v140 = vadd.f32 0.0, %v139
  %v141 = vpop.f32.mrb[0].mxu0
  %142 = vmatprep.mubr.bf16.mxu0 0
  %143 = vmatmul.mubr.bf16.gmra.mrb[0].mxu0 %v92
  %v144 = vpop.f32.mrb[0].mxu0
  %v145 = vadd.f32 0.0, %v144
  %v146 = vpop.f32.mrb[0].mxu0
  %v147 = vpop.f32.mrb[0].mxu0
  %v148 = vpop.f32.mrb[0].mxu0
  %149 = vdwg.mxu0
  %v150 = vadd.f32 %v29, %v129
  %v151 = vadd.f32 %v30, %v132
  %v152 = vadd.f32 %v31, %v137
  %v153 = vadd.f32 %v32, %v140
  %v154 = vadd.f32 %v33, %v145
  %vm155 = vcmask 261120
  %156 = vst.msk [vmem:[#allocation2] sm:$0xff] %vm155, %v150
  %157 = vst.msk [vmem:[#allocation2 + $0x8] sm:$0xff] %vm155, %v151
  %158 = vst.msk [vmem:[#allocation2 + $0x10] sm:$0xff] %vm155, %v152
  %159 = vst.msk [vmem:[#allocation2 + $0x18] sm:$0xff] %vm155, %v153
  %vm160 = vcmask 254976
  %161 = vst.msk [vmem:[#allocation2 + $0x20] sm:$0x3] %vm160, %v154
  // Predicated region
  $region22: #{vit_forward.17} parent=0 // pred_check
    %p162 = pneg %p18
  $region23: #{vit_forward.17} parent=0 // pred_check_branch
    %164 = sbr.rel (%p162) target = $region25
  $region24: #{vit_forward.17} parent=0 // pred_region
    %v165 = vld [vmem:[#allocation2] sm:$0xff]
    %v166 = vld [vmem:[#allocation2 + $0x8] sm:$0xff]
    %v167 = vld [vmem:[#allocation2 + $0x10] sm:$0xff]
    %v168 = vld [vmem:[#allocation2 + $0x18] sm:$0xff]
    %v169 = vld [vmem:[#allocation2 + $0x20] sm:$0x3]
    %v170 = vld [vmem:[%s2] sm:$0x1]
    %v172 = vlaneseq
    %v173 = vshrl.u32 %v172, 7
    %v174 = vsub.s32 0, %v173
    %v175 = vrot.slane %v170, %v174
    %v177 = vadd.f32 %v165, %v175
    %v178 = vadd.f32 %v166, %v175
    %v179 = vadd.f32 %v167, %v175
    %v180 = vadd.f32 %v168, %v175
    %v181 = vadd.f32 %v169, %v175
    %v182 = vld [vmem:[%s3] sm:$0xff]
    %v183 = vld [vmem:[%s3 + $0x8] sm:$0xff]
    %v184 = vld [vmem:[%s3 + $0x10] sm:$0xff]
    %v185 = vld [vmem:[%s3 + $0x18] sm:$0xff]
    %v186 = vld [vmem:[%s3 + $0x20] sm:$0x3]
    %v187 = vadd.f32 %v177, %v182
    %v188 = vadd.f32 %v178, %v183
    %v189 = vadd.f32 %v179, %v184
    %v190 = vadd.f32 %v180, %v185
    %v191 = vadd.f32 %v181, %v186
    %192 = vst.msk [vmem:[%s4] sm:$0xff] %vm155, %v187
    %193 = vst.msk [vmem:[%s4 + $0x8] sm:$0xff] %vm155, %v188
    %194 = vst.msk [vmem:[%s4 + $0x10] sm:$0xff] %vm155, %v189
    %195 = vst.msk [vmem:[%s4 + $0x18] sm:$0xff] %vm155, %v190
    %196 = vst.msk [vmem:[%s4 + $0x20] sm:$0x3] %vm160, %v191
  $region25: #{vit_forward.17} parent=0 // pred_fallthru
    _
  // Predicated region
  $region26: #{vit_forward.17} parent=0 // pred_check
    _
  $region27: #{vit_forward.17} parent=0 // pred_check_branch
    %198 = sbr.rel (0) target = $region29
  $region28: #{vit_forward.17} parent=0 // pred_region
    _
  $region29: #{vit_forward.17} parent=0 // pred_fallthru
    _
  // Predicated region
  $region30: #{vit_forward.17} parent=0 // pred_check
    _
  $region31: #{vit_forward.17} parent=0 // pred_check_branch
    %200 = sbr.rel (0) target = $region33
  $region32: #{vit_forward.17} parent=0 // pred_region
    _
  $region33: #{vit_forward.17} parent=0 // pred_fallthru
    _

// kernel: vit_forward.23
$region0: #{vit_forward.23}
  #allocation0 [shape = 'u32[]', space=smem, size = 0x4, offset = 0x4, fixed_abs, tag = 'smem constant byte address 0x4 - core index']
  #allocation1 [shape = 'u32[144,128]{1,0:T(1,128)}', space=vmem, size = 0x12000, scoped, tag = 'internal scratch']
  %s0 = inlined_call_operand.vmem [shape: f32[2,32], index: 0, kind: input, shape index: {}]
  %s1 = inlined_call_operand.vmem [shape: f32[1,32], index: 1, kind: input, shape index: {}]
  %s2 = inlined_call_operand.vmem [shape: f32[1,32], index: 2, kind: input, shape index: {}]
  %s3 = inlined_call_operand.vmem [shape: bf16[32,10], index: 3, kind: input, shape index: {}]
  %s4 = inlined_call_operand.vmem [shape: f32[1,10], index: 4, kind: input, shape index: {}]
  %s5 = inlined_call_operand.hbm [shape: f32[2,10], index: 5, kind: output, shape index: {}]
  %s6 = sld [smem:[#allocation0]]
  $region30: #{vit_forward.23} parent=0
    _
  %s8 = ssub.s32 1, %s6
  %s9 = scalar_select 0, %s8, %s6
  $region1: #{vit_forward.23} parent=0
    #allocation2 [shape = 'u8[1024]{0}', space=vmem, size = 0x400, scoped, tag = 'output window, operand 0, single buffered']
    #allocation3 [shape = 's32[1]{0}', space=sflag, size = 0x4, scoped, tag = 'scoped memory for vit_forward.23']
    %10 = vsyncpa [#allocation3], 0
    // Predicated region
    $region2: #{vit_forward.23} parent=1 // pred_check
      _
    $region3: #{vit_forward.23} parent=1 // pred_check_branch
      %12 = sbr.rel (0) target = $region5
    $region4: #{vit_forward.23} parent=1 // pred_region
      _
    $region5: #{vit_forward.23} parent=1 // pred_fallthru
      _
    // Predicated region
    $region6: #{vit_forward.23} parent=1 // pred_check
      _
    $region7: #{vit_forward.23} parent=1 // pred_check_branch
      %14 = sbr.rel (0) target = $region9
    $region8: #{vit_forward.23} parent=1 // pred_region
      _
    $region9: #{vit_forward.23} parent=1 // pred_fallthru
      _
    // Predicated region
    $region10: #{vit_forward.23} parent=1 // pred_check
      _
    $region11: #{vit_forward.23} parent=1 // pred_check_branch
      %16 = sbr.rel (0) target = $region13
    $region12: #{vit_forward.23} parent=1 // pred_region
      _
    $region13: #{vit_forward.23} parent=1 // pred_fallthru
      _
    // Predicated region
    $region14: #{vit_forward.23} parent=1 // pred_check
      _
    $region15: #{vit_forward.23} parent=1 // pred_check_branch
      %18 = sbr.rel (0) target = $region17
    $region16: #{vit_forward.23} parent=1 // pred_region
      _
    $region17: #{vit_forward.23} parent=1 // pred_fallthru
      _
    // Predicated region
    $region18: #{vit_forward.23} parent=1 // pred_check
      _
    $region19: #{vit_forward.23} parent=1 // pred_check_branch
      %20 = sbr.rel (0) target = $region21
    $region20: #{vit_forward.23} parent=1 // pred_region
      _
    $region21: #{vit_forward.23} parent=1 // pred_fallthru
      _
    %v22 = vld [vmem:[%s0] sm:$0x3]
    %vm23 = vcmask 254976
    %v24 = vsel %vm23, %v22, 0.0
    %25 = vadd.xlane.f32.xlu0 %v24
    %v26 = vpop.xlane.xlu0 %25
    %v27 = vrcp.pop 32.0
    %v28 = vmul.f32 %v26, %v27
    %v29 = vsub.f32 %v22, %v28
    %v30 = vmul.f32 %v29, %v29
    %v31 = vsel %vm23, %v30, 0.0
    %32 = vadd.xlane.f32.xlu0 %v31
    %v33 = vpop.xlane.xlu0 %32
    %v34 = vmul.f32 %v33, %v27
    %v35 = vadd.f32 %v34, 1e-06
    %v36 = vrsqrt.pop %v35
    %v37 = vmul.f32 %v29, %v36
    %v38 = vld [vmem:[%s1] sm:$0x1]
    %v40 = vlaneseq
    %v41 = vshrl.u32 %v40, 7
    %v42 = vsub.s32 0, %v41
    %v43 = vrot.slane %v38, %v42
    %v45 = vmul.f32 %v37, %v43
    %v46 = vld [vmem:[%s2] sm:$0x1]
    %v48 = vlaneseq
    %v49 = vshrl.u32 %v48, 7
    %v50 = vsub.s32 0, %v49
    %v51 = vrot.slane %v46, %v50
    %v53 = vadd.f32 %v45, %v51
    %v54 = vpack.c.bf16 %v53, %v53
    %v55 = vld [vmem:[%s3] sm:$0xf]
    %v56 = vld [vmem:[%s3 + $0x4] sm:$0xf]
    %v57 = vld [vmem:[%s3 + $0x8] sm:$0xf]
    %v58 = vld [vmem:[%s3 + $0xc] sm:$0xf]
    %v59 = vld [vmem:[%s4] sm:$0x1]
    %v61 = vlaneseq
    %v62 = vshrl.u32 %v61, 7
    %v63 = vsub.s32 0, %v62
    %v64 = vrot.slane %v59, %v63
    %v70 = vunpack.c.l.b16 %v55
    %v71 = vunpack.c.l.b16 %v56
    %v72 = vunpack.c.l.b16 %v57
    %v73 = vunpack.c.l.b16 %v58
    %v74 = vpack.c.b16 %v71, %v70
    %v75 = vpack.c.b16 %v73, %v72
    %vm78 = vcmask 261120
    %v80 = vsel %vm78, %v54, 0
    %82 = vmatprep.subr.bf16.mxu0 0
    %83 = vmatpush1.bf16.msra.mxu0 %v74
    %84 = vmatprep.subr.bf16.mxu0 0
    %85 = vmatpush1.bf16.msra.mxu0 %v75
    %86 = vmatprep.subr.bf16.mxu0 0
    %87 = vmatpush1.bf16.msra.mxu0 0
    %88 = vmatprep.subr.bf16.mxu0 0
    %89 = vmatpush1.bf16.msra.mxu0 0
    %90 = vmatprep.subr.bf16.mxu0 0
    %91 = vmatpush1.bf16.msra.mxu0 0
    %92 = vmatprep.subr.bf16.mxu0 0
    %93 = vmatpush1.bf16.msra.mxu0 0
    %94 = vmatprep.subr.bf16.mxu0 0
    %95 = vmatpush1.bf16.msra.mxu0 0
    %96 = vmatprep.subr.bf16.mxu0 0
    %97 = vmatpush1.bf16.msra.mxu0 0
    %98 = vmatprep.subr.bf16.mxu0 0
    %99 = vmatpush1.bf16.msra.mxu0 0
    %100 = vmatprep.subr.bf16.mxu0 0
    %101 = vmatpush1.bf16.msra.mxu0 0
    %102 = vmatprep.subr.bf16.mxu0 0
    %103 = vmatpush1.bf16.msra.mxu0 0
    %104 = vmatprep.subr.bf16.mxu0 0
    %105 = vmatpush1.bf16.msra.mxu0 0
    %106 = vmatprep.subr.bf16.mxu0 0
    %107 = vmatpush1.bf16.msra.mxu0 0
    %108 = vmatprep.subr.bf16.mxu0 0
    %109 = vmatpush1.bf16.msra.mxu0 0
    %110 = vmatprep.subr.bf16.mxu0 0
    %111 = vmatpush1.bf16.msra.mxu0 0
    %112 = vmatprep.subr.bf16.mxu0 0
    %113 = vmatpush1.bf16.msra.mxu0 0
    %114 = vmatprep.mubr.bf16.mxu0 0
    %115 = vmatmul.mubr.bf16.gmra.mrb[0].mxu0 %v80
    %v116 = vpop.f32.mrb[0].mxu0
    %v117 = vadd.f32 %v64, %v116
    %v118 = vpop.f32.mrb[0].mxu0
    %v119 = vpop.f32.mrb[0].mxu0
    %v120 = vpop.f32.mrb[0].mxu0
    %121 = vdwg.mxu0
    %vm122 = vcmask 74752
    %123 = vst.msk [vmem:[#allocation2] sm:$0x3] %vm122, %v117
    // Predicated region
    $region22: #{vit_forward.23} parent=1 // pred_check
      _
    $region23: #{vit_forward.23} parent=1 // pred_check_branch
      %125 = sbr.rel (0) target = $region25
    $region24: #{vit_forward.23} parent=1 // pred_region
      %s127 = ssub.s32 32, 32
      %128 = vsyncadd [#allocation3], %s127
      %s130 = sshll.u32 [#allocation2], 4
      %s131 = int_to_ptr.vmem [resolvable:$true] %s130
      %133 = dma.vmem_to_hbm [thread:$0]  %s131, 32, %s5, [#allocation3]
    $region25: #{vit_forward.23} parent=1 // pred_fallthru
      _
    // Predicated region
    $region26: #{vit_forward.23} parent=1 // pred_check
      _
    $region27: #{vit_forward.23} parent=1 // pred_check_branch
      %135 = sbr.rel (0) target = $region29
    $region28: #{vit_forward.23} parent=1 // pred_region
      %136 = dma.done [#allocation3], 32
    $region29: #{vit_forward.23} parent=1 // pred_fallthru
      _
    %137 = vsyncpa [#allocation3], 1

</llo_original>
